<compile_context>
chip_gen: v7x
topology: tpu7x:2x2x1
jax: 0.10.0
libtpu: 0.0.40
codegen_flags: <defaults>
</compile_context>

<pallas_src>
import jax
import jax.numpy as jnp
from jax import lax
from jax.experimental import pallas as pl
from jax.experimental.pallas import tpu as pltpu


def _make_cnn_kernel(B_blk, H1, W1, W1P, H2, W2, C1, C2):
    """H1,W1: pooled (post 2x2) dims; W1P: padded row width (>= W1+2, 8-aligned)."""
    M1 = H1 * W1P  # rows of one pooled / conv2-activation slab (cols padded to W1P)

    def kernel(p_ref, w1_ref, b1_ref, w2_ref, b2_ref, out_ref, s_ref, ps_ref):
        # ---- conv1: ONE matmul for the whole batch block (bf16 in, f32 acc) ---
        z = jnp.dot(p_ref[...], w1_ref[...],
                    preferred_element_type=jnp.float32)        # (B_blk*4*M1, C1)

        col_ok = (lax.broadcasted_iota(jnp.int32, (M1, C1), 0) % W1P) < W1
        zpad = jnp.zeros((W1P + 1, C1), jnp.bfloat16)

        for b in range(B_blk):
            base = b * 4 * M1
            # 2x2 max-pool == max over the 4 quadrant slabs (bias/ReLU commute)
            m = jnp.maximum(
                jnp.maximum(z[base:base + M1], z[base + M1:base + 2 * M1]),
                jnp.maximum(z[base + 2 * M1:base + 3 * M1],
                            z[base + 3 * M1:base + 4 * M1]))    # (M1, C1)
            pooled = jnp.maximum(m + b1_ref[...], 0.0)
            # zero padded columns j >= W1 so they double as conv2's zero padding
            pooled = jnp.where(col_ok, pooled, 0.0).astype(jnp.bfloat16)

            # ---- scatter into flat zero-bordered scratch -----------------------
            # s_ref row (1+i)*W1P + (1+j) == pool1[i, j]; only the rows conv2 can
            # read are (re)zeroed each step (safe under megacore sharding).
            s_ref[pl.ds(0, W1P + 1), :] = zpad                          # top border
            s_ref[pl.ds((H1 + 1) * W1P + 1, W1P + 1), :] = zpad         # bottom border
            s_ref[pl.ds(W1P + 1, M1), :] = pooled                       # interior

            # ---- conv2: 9 taps fused into one (M1, 9*C1) @ (9*C1, C2) matmul ---
            op = jnp.concatenate(
                [s_ref[pl.ds(dy * W1P + dx, M1), :]
                 for dy in range(3) for dx in range(3)], axis=-1)       # (M1, 144)
            acc = jnp.dot(op, w2_ref[...], preferred_element_type=jnp.float32)
            y2 = jnp.maximum(acc + b2_ref[...], 0.0)            # (M1, C2), row=y*W1P+x

            # ---- maxpool 6x6: row-band maxima -> strided column maxima ---------
            for I in range(H2):
                mI = y2[6 * I * W1P:(6 * I + 1) * W1P, :]
                for r in range(1, 6):
                    mI = jnp.maximum(
                        mI, y2[(6 * I + r) * W1P:(6 * I + r + 1) * W1P, :])
                ps_ref[pl.ds(I * W1, W1), :] = mI[:W1, :]       # valid columns only
            colmax = ps_ref[pl.ds(0, H2 * W2, stride=6), :]
            for r in range(1, 6):
                colmax = jnp.maximum(colmax,
                                     ps_ref[pl.ds(r, H2 * W2, stride=6), :])
            out_ref[b, :, :] = colmax                           # one wide store/image

    return kernel


def cnn_forward(x_nchw, w1, b1, w2, b2, *, batch_block=None):
    """Pallas forward.  x_nchw: (N, 3, H, W) with H, W multiples of 12."""
    N, Cin, H, W = x_nchw.shape
    assert Cin == 3 and H % 12 == 0 and W % 12 == 0
    H1, W1 = H // 2, W // 2
    H2, W2 = H1 // 6, W1 // 6
    C1, C2 = w1.shape[3], w2.shape[3]
    K1 = 9 * Cin
    W1P = ((W1 + 2 + 7) // 8) * 8          # padded pooled-row width (>= W1+2)
    M1 = H1 * W1P

    # Batch blocking: amortize the per-grid-step overhead while keeping >= 2
    # grid steps so megacore ("parallel") still has work for both TensorCores.
    if batch_block is None:
        batch_block = 1
        for cand in range(min(N, 8), 0, -1):
            if N % cand == 0 and (N // cand >= 2 or N == 1):
                batch_block = cand
                break
    B_blk = batch_block
    assert N % B_blk == 0

    x = jnp.transpose(x_nchw, (0, 2, 3, 1)).astype(jnp.float32)        # NHWC
    xp = jnp.pad(x, ((0, 0), (1, 1), (1, 1), (0, 0)))                  # conv1 pad=1

    # im2col for conv1: K ordering (dy, dx, ci) matches w1.reshape(K1, C1)
    patches = jnp.concatenate(
        [xp[:, dy:dy + H, dx:dx + W, :] for dy in range(3) for dx in range(3)],
        axis=-1)                                                        # (N, H, W, 27)
    # group by 2x2-pool quadrant (r, p); pad pooled-col dim j to W1P with zeros
    pq = patches.reshape(N, H1, 2, W1, 2, K1).transpose(0, 2, 4, 1, 3, 5)
    pq = jnp.pad(pq, ((0, 0),) * 4 + ((0, W1P - W1), (0, 0)))
    pq = pq.reshape(N * 4 * M1, K1).astype(jnp.bfloat16)   # bf16 halves DMA + VMEM
    # TODO(synk): for large H/W, drop this host-side im2col (9x HBM inflation) and
    # build the 27-wide conv1 operand in-kernel from 9 shifted slices of the raw
    # padded image, tiling over H1 so the padded footprint fits v7x's 64 MiB.

    w1r = w1.reshape(K1, C1).astype(jnp.bfloat16)
    w2r = w2.reshape(9 * C1, C2).astype(jnp.bfloat16)      # (dy*3+dx)*C1 + ci order
    b1r = b1.reshape(1, C1).astype(jnp.float32)
    b2r = b2.reshape(1, C2).astype(jnp.float32)

    kernel = _make_cnn_kernel(B_blk, H1, W1, W1P, H2, W2, C1, C2)

    # VMEM budget with (8, 128) tile padding: double-buffered pq block dominates.
    def _padded(rows, cols, itemsize):
        return ((rows + 7) // 8 * 8) * ((cols + 127) // 128 * 128) * itemsize
    vmem_est = (2 * _padded(B_blk * 4 * M1, K1, 2)            # pq, double buffered
                + _padded(K1, C1, 2) + _padded(9 * C1, C2, 2) # weights
                + _padded((H1 + 3) * W1P, C1, 2)              # conv2-input scratch
                + _padded(H2 * W1, C2, 4)                     # pool scratch
                + 2 * _padded(B_blk * H2 * W2, C2, 4)         # output blocks
                + (2 << 20))                                  # headroom
    vmem_limit = int(min(max(vmem_est, 32 << 20), 64 << 20))

    out = pl.pallas_call(
        kernel,
        out_shape=jax.ShapeDtypeStruct((N, H2 * W2, C2), jnp.float32),
        grid_spec=pltpu.PrefetchScalarGridSpec(
            num_scalar_prefetch=0,
            grid=(N // B_blk,),
            in_specs=[
                pl.BlockSpec((B_blk * 4 * M1, K1), lambda b: (b, 0)),
                pl.BlockSpec((K1, C1), lambda b: (0, 0)),
                pl.BlockSpec((1, C1), lambda b: (0, 0)),
                pl.BlockSpec((9 * C1, C2), lambda b: (0, 0)),
                pl.BlockSpec((1, C2), lambda b: (0, 0)),
            ],
            out_specs=pl.BlockSpec((B_blk, H2 * W2, C2), lambda b: (b, 0, 0)),
            scratch_shapes=[
                pltpu.VMEM(((H1 + 3) * W1P, C1), jnp.bfloat16),  # conv2 input slab
                pltpu.VMEM((H2 * W1, C2), jnp.float32),          # 6x6-pool scratch
            ],
        ),
        compiler_params=pltpu.CompilerParams(
            dimension_semantics=("parallel",),      # shard batch across TCs (v7x)
            vmem_limit_bytes=vmem_limit),
    )(pq, w1r, b1r, w2r, b2r)

    out = out.reshape(N, H2, W2, C2)
    # TODO(synk): for large H2*W2*C2 (>=128), emit the output as a lane-dense
    # (N, H2, W2*C2) slab to turn the final masked store into a full vst.
    return jnp.transpose(out, (0, 3, 1, 2))                            # back to NCHW


def reference_forward(x_nchw, w1, b1, w2, b2):
    """Pure-JAX reference (same math as the PyTorch module)."""
    x = jnp.transpose(x_nchw, (0, 2, 3, 1))
    dn = ("NHWC", "HWIO", "NHWC")
    y = jax.lax.conv_general_dilated(x, w1, (1, 1), ((1, 1), (1, 1)),
                                     dimension_numbers=dn)
    y = jnp.maximum(y + b1.reshape(1, 1, 1, -1), 0.0)
    y = jax.lax.reduce_window(y, -jnp.inf, jax.lax.max,
                              (1, 2, 2, 1), (1, 2, 2, 1), "VALID")
    y = jax.lax.conv_general_dilated(y, w2, (1, 1), ((1, 1), (1, 1)),
                                     dimension_numbers=dn)
    y = jnp.maximum(y + b2.reshape(1, 1, 1, -1), 0.0)
    y = jax.lax.reduce_window(y, -jnp.inf, jax.lax.max,
                              (1, 6, 6, 1), (1, 6, 6, 1), "VALID")
    return jnp.transpose(y, (0, 3, 1, 2))


def init_params(key):
    k1, k2, k3, k4 = jax.random.split(key, 4)
    w1 = jax.random.normal(k1, (3, 3, 3, 16), jnp.float32) * 0.1    # HWIO
    b1 = jax.random.normal(k2, (1, 16), jnp.float32) * 0.1
    w2 = jax.random.normal(k3, (3, 3, 16, 32), jnp.float32) * 0.1   # HWIO
    b2 = jax.random.normal(k4, (1, 32), jnp.float32) * 0.1
    return w1, b1, w2, b2


if __name__ == "__main__":
    key = jax.random.PRNGKey(0)
    kx, kp = jax.random.split(key)
    # batch=2, C=3, spatial=24 (divisible by 2*6) -> output (2, 32, 2, 2).
    x = jax.random.normal(kx, (2, 3, 24, 24), jnp.float32)            # NCHW
    w1, b1, w2, b2 = init_params(kp)

    out = cnn_forward(x, w1, b1, w2, b2)
    out = jax.block_until_ready(out)
    assert out.shape == (2, 32, 2, 2), out.shape

    ref = reference_forward(x, w1, b1, w2, b2)
    max_err = float(jnp.max(jnp.abs(out - ref)))
    assert max_err < 5e-2, f"max abs err vs reference: {max_err}"

    print("KERNEL_OK")
</pallas_src>

<mosaic_0001>
module attributes {stable_mosaic.version = 11 : i64} {
  func.func @kernel(%arg0: i32, %arg1: memref<768x27xbf16, #tpu.memory_space<vmem>>, %arg2: memref<27x16xbf16, #tpu.memory_space<vmem>>, %arg3: memref<1x16xf32, #tpu.memory_space<vmem>>, %arg4: memref<144x32xbf16, #tpu.memory_space<vmem>>, %arg5: memref<1x32xf32, #tpu.memory_space<vmem>>, %arg6: memref<1x4x32xf32, #tpu.memory_space<vmem>>, %arg7: memref<240x16xbf16, #tpu.memory_space<vmem>>, %arg8: memref<24x32xf32, #tpu.memory_space<vmem>>) attributes {dimension_semantics = [#tpu.dimension_semantics<parallel>], iteration_bounds = array<i64: 2>, scalar_prefetch = 0 : i64, scratch_operands = 2 : i64, tpu.core_type = #tpu.core_type<tc>, window_params = [{transform_indices = @transform_0, window_bounds = array<i64: 768, 27>}, {pipeline_mode = #tpu.pipeline_mode<synchronous>, transform_indices = @transform_1, window_bounds = array<i64: 27, 16>}, {pipeline_mode = #tpu.pipeline_mode<synchronous>, transform_indices = @transform_2, window_bounds = array<i64: 1, 16>}, {pipeline_mode = #tpu.pipeline_mode<synchronous>, transform_indices = @transform_3, window_bounds = array<i64: 144, 32>}, {pipeline_mode = #tpu.pipeline_mode<synchronous>, transform_indices = @transform_4, window_bounds = array<i64: 1, 32>}, {transform_indices = @transform_5, window_bounds = array<i64: 1, 4, 32>}]} {
    %c0 = arith.constant 0 : index
    %c0_0 = arith.constant 0 : index
    %0 = vector.load %arg1[%c0, %c0_0] : memref<768x27xbf16, #tpu.memory_space<vmem>>, vector<768x27xbf16>
    %c0_1 = arith.constant 0 : index
    %c0_2 = arith.constant 0 : index
    %1 = vector.load %arg2[%c0_1, %c0_2] : memref<27x16xbf16, #tpu.memory_space<vmem>>, vector<27x16xbf16>
    %cst = arith.constant dense<0.000000e+00> : vector<768x16xf32>
    %2 = tpu.matmul %0, %1, %cst {dimension_numbers = #tpu.dot_dimension_numbers<[1], [0], [0], [1], [0, 0, 1, 1], [], []>} : vector<768x27xbf16>, vector<27x16xbf16>, vector<768x16xf32> -> vector<768x16xf32>
    %3 = tpu.iota {dimensions = array<i32: 0>} : vector<192x16xi32>
    %c16_i32 = arith.constant 16 : i32
    %c0_i32 = arith.constant 0 : i32
    %4 = arith.cmpi eq, %c16_i32, %c0_i32 : i32
    %c1_i32 = arith.constant 1 : i32
    %5 = arith.select %4, %c1_i32, %c16_i32 : i32
    %6 = vector.broadcast %5 : i32 to vector<192x16xi32>
    %7 = arith.remsi %3, %6 : vector<192x16xi32>
    %c0_i32_3 = arith.constant 0 : i32
    %8 = vector.broadcast %c0_i32_3 : i32 to vector<192x16xi32>
    %9 = arith.cmpi ne, %7, %8 : vector<192x16xi32>
    %c0_i32_4 = arith.constant 0 : i32
    %10 = vector.broadcast %c0_i32_4 : i32 to vector<192x16xi32>
    %11 = arith.cmpi slt, %7, %10 : vector<192x16xi32>
    %c0_i32_5 = arith.constant 0 : i32
    %12 = arith.cmpi slt, %5, %c0_i32_5 : i32
    %13 = vector.broadcast %12 : i1 to vector<192x16xi1>
    %14 = vector.broadcast %13 : vector<192x16xi1> to vector<192x16xi1>
    %15 = arith.xori %11, %14 : vector<192x16xi1>
    %16 = arith.andi %15, %9 : vector<192x16xi1>
    %17 = vector.broadcast %5 : i32 to vector<192x16xi32>
    %18 = arith.addi %7, %17 : vector<192x16xi32>
    %19 = arith.select %16, %18, %7 : vector<192x16xi1>, vector<192x16xi32>
    %c12_i32 = arith.constant 12 : i32
    %20 = vector.broadcast %c12_i32 : i32 to vector<192x16xi32>
    %21 = arith.cmpi slt, %19, %20 : vector<192x16xi32>
    %cst_6 = arith.constant 0.000000e+00 : bf16
    %22 = vector.broadcast %cst_6 : bf16 to vector<17x16xbf16>
    %23 = vector.extract_strided_slice %2 {offsets = [0, 0], sizes = [192, 16], strides = [1, 1]} : vector<768x16xf32> to vector<192x16xf32>
    %24 = vector.extract_strided_slice %2 {offsets = [192, 0], sizes = [192, 16], strides = [1, 1]} : vector<768x16xf32> to vector<192x16xf32>
    %25 = arith.maximumf %23, %24 : vector<192x16xf32>
    %26 = vector.extract_strided_slice %2 {offsets = [384, 0], sizes = [192, 16], strides = [1, 1]} : vector<768x16xf32> to vector<192x16xf32>
    %27 = vector.extract_strided_slice %2 {offsets = [576, 0], sizes = [192, 16], strides = [1, 1]} : vector<768x16xf32> to vector<192x16xf32>
    %28 = arith.maximumf %26, %27 : vector<192x16xf32>
    %29 = arith.maximumf %25, %28 : vector<192x16xf32>
    %c0_7 = arith.constant 0 : index
    %c0_8 = arith.constant 0 : index
    %30 = vector.load %arg3[%c0_7, %c0_8] : memref<1x16xf32, #tpu.memory_space<vmem>>, vector<1x16xf32>
    %31 = vector.broadcast %30 : vector<1x16xf32> to vector<192x16xf32>
    %32 = arith.addf %29, %31 : vector<192x16xf32>
    %cst_9 = arith.constant 0.000000e+00 : f32
    %33 = vector.broadcast %cst_9 : f32 to vector<192x16xf32>
    %34 = arith.maximumf %32, %33 : vector<192x16xf32>
    %cst_10 = arith.constant 0.000000e+00 : f32
    %35 = vector.broadcast %cst_10 : f32 to vector<192x16xf32>
    %36 = arith.select %21, %34, %35 : vector<192x16xi1>, vector<192x16xf32>
    %37 = arith.truncf %36 : vector<192x16xf32> to vector<192x16xbf16>
    %c0_11 = arith.constant 0 : index
    %c0_12 = arith.constant 0 : index
    %38 = vector.load %arg7[%c0_11, %c0_12] : memref<240x16xbf16, #tpu.memory_space<vmem>>, vector<17x16xbf16>
    tpu.vector_store %arg7[%c0_11, %c0_12], %22 {strides = array<i32>} : memref<240x16xbf16, #tpu.memory_space<vmem>>, vector<17x16xbf16>,
    %c209 = arith.constant 209 : index
    %c0_13 = arith.constant 0 : index
    %39 = vector.load %arg7[%c209, %c0_13] : memref<240x16xbf16, #tpu.memory_space<vmem>>, vector<17x16xbf16>
    tpu.vector_store %arg7[%c209, %c0_13], %22 {strides = array<i32>} : memref<240x16xbf16, #tpu.memory_space<vmem>>, vector<17x16xbf16>,
    %c17 = arith.constant 17 : index
    %c0_14 = arith.constant 0 : index
    %40 = vector.load %arg7[%c17, %c0_14] : memref<240x16xbf16, #tpu.memory_space<vmem>>, vector<192x16xbf16>
    tpu.vector_store %arg7[%c17, %c0_14], %37 {strides = array<i32>} : memref<240x16xbf16, #tpu.memory_space<vmem>>, vector<192x16xbf16>,
    %c0_15 = arith.constant 0 : index
    %c0_16 = arith.constant 0 : index
    %41 = vector.load %arg7[%c0_15, %c0_16] : memref<240x16xbf16, #tpu.memory_space<vmem>>, vector<192x16xbf16>
    %c1 = arith.constant 1 : index
    %c0_17 = arith.constant 0 : index
    %42 = vector.load %arg7[%c1, %c0_17] : memref<240x16xbf16, #tpu.memory_space<vmem>>, vector<192x16xbf16>
    %c2 = arith.constant 2 : index
    %c0_18 = arith.constant 0 : index
    %43 = vector.load %arg7[%c2, %c0_18] : memref<240x16xbf16, #tpu.memory_space<vmem>>, vector<192x16xbf16>
    %c16 = arith.constant 16 : index
    %c0_19 = arith.constant 0 : index
    %44 = vector.load %arg7[%c16, %c0_19] : memref<240x16xbf16, #tpu.memory_space<vmem>>, vector<192x16xbf16>
    %c17_20 = arith.constant 17 : index
    %c0_21 = arith.constant 0 : index
    %45 = vector.load %arg7[%c17_20, %c0_21] : memref<240x16xbf16, #tpu.memory_space<vmem>>, vector<192x16xbf16>
    %c18 = arith.constant 18 : index
    %c0_22 = arith.constant 0 : index
    %46 = vector.load %arg7[%c18, %c0_22] : memref<240x16xbf16, #tpu.memory_space<vmem>>, vector<192x16xbf16>
    %c32 = arith.constant 32 : index
    %c0_23 = arith.constant 0 : index
    %47 = vector.load %arg7[%c32, %c0_23] : memref<240x16xbf16, #tpu.memory_space<vmem>>, vector<192x16xbf16>
    %c33 = arith.constant 33 : index
    %c0_24 = arith.constant 0 : index
    %48 = vector.load %arg7[%c33, %c0_24] : memref<240x16xbf16, #tpu.memory_space<vmem>>, vector<192x16xbf16>
    %c34 = arith.constant 34 : index
    %c0_25 = arith.constant 0 : index
    %49 = vector.load %arg7[%c34, %c0_25] : memref<240x16xbf16, #tpu.memory_space<vmem>>, vector<192x16xbf16>
    %50 = tpu.concatenate %41, %42, %43, %44, %45, %46, %47, %48, %49 in 1 : vector<192x16xbf16>, vector<192x16xbf16>, vector<192x16xbf16>, vector<192x16xbf16>, vector<192x16xbf16>, vector<192x16xbf16>, vector<192x16xbf16>, vector<192x16xbf16>, vector<192x16xbf16> -> vector<192x144xbf16>
    %c0_26 = arith.constant 0 : index
    %c0_27 = arith.constant 0 : index
    %51 = vector.load %arg4[%c0_26, %c0_27] : memref<144x32xbf16, #tpu.memory_space<vmem>>, vector<144x32xbf16>
    %cst_28 = arith.constant dense<0.000000e+00> : vector<192x32xf32>
    %52 = tpu.matmul %50, %51, %cst_28 {dimension_numbers = #tpu.dot_dimension_numbers<[1], [0], [0], [1], [0, 0, 1, 1], [], []>} : vector<192x144xbf16>, vector<144x32xbf16>, vector<192x32xf32> -> vector<192x32xf32>
    %c0_29 = arith.constant 0 : index
    %c0_30 = arith.constant 0 : index
    %53 = vector.load %arg5[%c0_29, %c0_30] : memref<1x32xf32, #tpu.memory_space<vmem>>, vector<1x32xf32>
    %54 = vector.broadcast %53 : vector<1x32xf32> to vector<192x32xf32>
    %55 = arith.addf %52, %54 : vector<192x32xf32>
    %cst_31 = arith.constant 0.000000e+00 : f32
    %56 = vector.broadcast %cst_31 : f32 to vector<192x32xf32>
    %57 = arith.maximumf %55, %56 : vector<192x32xf32>
    %58 = vector.extract_strided_slice %57 {offsets = [0, 0], sizes = [16, 32], strides = [1, 1]} : vector<192x32xf32> to vector<16x32xf32>
    %59 = vector.extract_strided_slice %57 {offsets = [16, 0], sizes = [16, 32], strides = [1, 1]} : vector<192x32xf32> to vector<16x32xf32>
    %60 = arith.maximumf %58, %59 : vector<16x32xf32>
    %61 = vector.extract_strided_slice %57 {offsets = [32, 0], sizes = [16, 32], strides = [1, 1]} : vector<192x32xf32> to vector<16x32xf32>
    %62 = arith.maximumf %60, %61 : vector<16x32xf32>
    %63 = vector.extract_strided_slice %57 {offsets = [48, 0], sizes = [16, 32], strides = [1, 1]} : vector<192x32xf32> to vector<16x32xf32>
    %64 = arith.maximumf %62, %63 : vector<16x32xf32>
    %65 = vector.extract_strided_slice %57 {offsets = [64, 0], sizes = [16, 32], strides = [1, 1]} : vector<192x32xf32> to vector<16x32xf32>
    %66 = arith.maximumf %64, %65 : vector<16x32xf32>
    %67 = vector.extract_strided_slice %57 {offsets = [80, 0], sizes = [16, 32], strides = [1, 1]} : vector<192x32xf32> to vector<16x32xf32>
    %68 = arith.maximumf %66, %67 : vector<16x32xf32>
    %69 = vector.extract_strided_slice %68 {offsets = [0, 0], sizes = [12, 32], strides = [1, 1]} : vector<16x32xf32> to vector<12x32xf32>
    %c0_32 = arith.constant 0 : index
    %c0_33 = arith.constant 0 : index
    %70 = vector.load %arg8[%c0_32, %c0_33] : memref<24x32xf32, #tpu.memory_space<vmem>>, vector<12x32xf32>
    tpu.vector_store %arg8[%c0_32, %c0_33], %69 {strides = array<i32>} : memref<24x32xf32, #tpu.memory_space<vmem>>, vector<12x32xf32>,
    %71 = vector.extract_strided_slice %57 {offsets = [96, 0], sizes = [16, 32], strides = [1, 1]} : vector<192x32xf32> to vector<16x32xf32>
    %72 = vector.extract_strided_slice %57 {offsets = [112, 0], sizes = [16, 32], strides = [1, 1]} : vector<192x32xf32> to vector<16x32xf32>
    %73 = arith.maximumf %71, %72 : vector<16x32xf32>
    %74 = vector.extract_strided_slice %57 {offsets = [128, 0], sizes = [16, 32], strides = [1, 1]} : vector<192x32xf32> to vector<16x32xf32>
    %75 = arith.maximumf %73, %74 : vector<16x32xf32>
    %76 = vector.extract_strided_slice %57 {offsets = [144, 0], sizes = [16, 32], strides = [1, 1]} : vector<192x32xf32> to vector<16x32xf32>
    %77 = arith.maximumf %75, %76 : vector<16x32xf32>
    %78 = vector.extract_strided_slice %57 {offsets = [160, 0], sizes = [16, 32], strides = [1, 1]} : vector<192x32xf32> to vector<16x32xf32>
    %79 = arith.maximumf %77, %78 : vector<16x32xf32>
    %80 = vector.extract_strided_slice %57 {offsets = [176, 0], sizes = [16, 32], strides = [1, 1]} : vector<192x32xf32> to vector<16x32xf32>
    %81 = arith.maximumf %79, %80 : vector<16x32xf32>
    %82 = vector.extract_strided_slice %81 {offsets = [0, 0], sizes = [12, 32], strides = [1, 1]} : vector<16x32xf32> to vector<12x32xf32>
    %c12 = arith.constant 12 : index
    %c0_34 = arith.constant 0 : index
    %83 = vector.load %arg8[%c12, %c0_34] : memref<24x32xf32, #tpu.memory_space<vmem>>, vector<12x32xf32>
    tpu.vector_store %arg8[%c12, %c0_34], %82 {strides = array<i32>} : memref<24x32xf32, #tpu.memory_space<vmem>>, vector<12x32xf32>,
    %c0_35 = arith.constant 0 : index
    %c0_36 = arith.constant 0 : index
    %84 = tpu.strided_load %arg8[%c0_35, %c0_36] {strides = array<i32: 6, 1>} : memref<24x32xf32, #tpu.memory_space<vmem>>, vector<4x32xf32>
    %c1_37 = arith.constant 1 : index
    %c0_38 = arith.constant 0 : index
    %85 = tpu.strided_load %arg8[%c1_37, %c0_38] {strides = array<i32: 6, 1>} : memref<24x32xf32, #tpu.memory_space<vmem>>, vector<4x32xf32>
    %86 = arith.maximumf %84, %85 : vector<4x32xf32>
    %c2_39 = arith.constant 2 : index
    %c0_40 = arith.constant 0 : index
    %87 = tpu.strided_load %arg8[%c2_39, %c0_40] {strides = array<i32: 6, 1>} : memref<24x32xf32, #tpu.memory_space<vmem>>, vector<4x32xf32>
    %88 = arith.maximumf %86, %87 : vector<4x32xf32>
    %c3 = arith.constant 3 : index
    %c0_41 = arith.constant 0 : index
    %89 = tpu.strided_load %arg8[%c3, %c0_41] {strides = array<i32: 6, 1>} : memref<24x32xf32, #tpu.memory_space<vmem>>, vector<4x32xf32>
    %90 = arith.maximumf %88, %89 : vector<4x32xf32>
    %c4 = arith.constant 4 : index
    %c0_42 = arith.constant 0 : index
    %91 = tpu.strided_load %arg8[%c4, %c0_42] {strides = array<i32: 6, 1>} : memref<24x32xf32, #tpu.memory_space<vmem>>, vector<4x32xf32>
    %92 = arith.maximumf %90, %91 : vector<4x32xf32>
    %c5 = arith.constant 5 : index
    %c0_43 = arith.constant 0 : index
    %93 = tpu.strided_load %arg8[%c5, %c0_43] {strides = array<i32: 6, 1>} : memref<24x32xf32, #tpu.memory_space<vmem>>, vector<4x32xf32>
    %94 = arith.maximumf %92, %93 : vector<4x32xf32>
    %c0_44 = arith.constant 0 : index
    %c0_45 = arith.constant 0 : index
    %c0_46 = arith.constant 0 : index
    %95 = vector.load %arg6[%c0_44, %c0_45, %c0_46] : memref<1x4x32xf32, #tpu.memory_space<vmem>>, vector<1x4x32xf32>
    %96 = vector.shape_cast %95 : vector<1x4x32xf32> to vector<4x32xf32>
    %97 = vector.shape_cast %94 : vector<4x32xf32> to vector<1x4x32xf32>
    tpu.vector_store %arg6[%c0_44, %c0_45, %c0_46], %97 {strides = array<i32>} : memref<1x4x32xf32, #tpu.memory_space<vmem>>, vector<1x4x32xf32>,
    return
  }
  func.func @transform_0(%arg0: i32) -> (i32, i32) {
    %c0_i32 = arith.constant 0 : i32
    %c0_i32_0 = arith.constant 0 : i32
    return %arg0, %c0_i32 : i32, i32
  }
  func.func @transform_1(%arg0: i32) -> (i32, i32) {
    %c0_i32 = arith.constant 0 : i32
    %c0_i32_0 = arith.constant 0 : i32
    %c0_i32_1 = arith.constant 0 : i32
    return %c0_i32, %c0_i32_0 : i32, i32
  }
  func.func @transform_2(%arg0: i32) -> (i32, i32) {
    %c0_i32 = arith.constant 0 : i32
    %c0_i32_0 = arith.constant 0 : i32
    %c0_i32_1 = arith.constant 0 : i32
    return %c0_i32, %c0_i32_0 : i32, i32
  }
  func.func @transform_3(%arg0: i32) -> (i32, i32) {
    %c0_i32 = arith.constant 0 : i32
    %c0_i32_0 = arith.constant 0 : i32
    %c0_i32_1 = arith.constant 0 : i32
    return %c0_i32, %c0_i32_0 : i32, i32
  }
  func.func @transform_4(%arg0: i32) -> (i32, i32) {
    %c0_i32 = arith.constant 0 : i32
    %c0_i32_0 = arith.constant 0 : i32
    %c0_i32_1 = arith.constant 0 : i32
    return %c0_i32, %c0_i32_0 : i32, i32
  }
  func.func @transform_5(%arg0: i32) -> (i32, i32, i32) {
    %c0_i32 = arith.constant 0 : i32
    %c0_i32_0 = arith.constant 0 : i32
    %c0_i32_1 = arith.constant 0 : i32
    return %arg0, %c0_i32, %c0_i32_0 : i32, i32, i32
  }
}

</mosaic_0001>

<llo_original>
// kernel: tpu_custom_call.1
$region0: #{tpu_custom_call.1}
  #allocation0 [shape = 'u32[]', space=smem, size = 0x4, offset = 0x4, fixed_abs, tag = 'smem constant byte address 0x4 - core index']
  #allocation1 [shape = 'u32[144,128]{1,0:T(1,128)}', space=vmem, size = 0x12000, scoped, tag = 'internal scratch']
  #allocation2 [shape = 'bf16[240,16]{1,0:T(16,128)(2,1)}', space=vmem, size = 0xf000, scoped, tag = 'scratch operand']
  #allocation3 [shape = 'f32[24,32]{1,0:T(8,128)}', space=vmem, size = 0x3000, scoped, tag = 'scratch operand']
  %s0 = inlined_call_operand.vmem [shape: bf16[1536,27], index: 0, kind: input, shape index: {}]
  %s1 = inlined_call_operand.vmem [shape: bf16[27,16], index: 1, kind: input, shape index: {}]
  %s2 = inlined_call_operand.vmem [shape: f32[1,16], index: 2, kind: input, shape index: {}]
  %s3 = inlined_call_operand.vmem [shape: bf16[144,32], index: 3, kind: input, shape index: {}]
  %s4 = inlined_call_operand.vmem [shape: f32[1,32], index: 4, kind: input, shape index: {}]
  %s5 = inlined_call_operand.hbm [shape: f32[2,4,32], index: 5, kind: output, shape index: {}]
  %s6 = sld [smem:[#allocation0]]
  $region53: #{tpu_custom_call.1} parent=0
    _
  %s8 = ssub.s32 1, %s6
  %s9 = scalar_select 0, %s8, %s6
  $region1: #{tpu_custom_call.1} parent=0
    #allocation4 [shape = 'u8[4096]{0}', space=vmem, size = 0x1000, scoped, tag = 'output window, operand 0']
    #allocation5 [shape = 's32[2]{0}', space=sflag, size = 0x8, scoped, tag = 'scoped memory for tpu_custom_call.1']
    %10 = vsyncpa [#allocation5], 0
    %s11 = scalar_lea.sflag [#allocation5], 1
    %12 = vsyncpa %s11, 0
    loop: start=0, step=1, limit=4
    $region2: #{tpu_custom_call.1} parent=1 // loop_pre_header
      _
    $region3: #{tpu_custom_call.1} parent=1 // loop_header
      %s14 = sphi 0, %s18
      %p15 = scmp.ge.s32.totalorder %s14, 4
      %s24 = sphi 0, %s26
      %s27 = sphi 0, %s24
      %s28 = sphi 0, %s27
      %s44 = sphi 0, %s28
      %s48 = sphi 0, %s48
      %s50 = sphi 0, %s48
      %s51 = sphi 0, %s50
      %s65 = sphi 0, %s51
      %s69 = sphi 0, %s69
      %s71 = sphi 0, %s69
      %s72 = sphi 0, %s71
      %s86 = sphi 0, %s72
      %s90 = sphi 0, %s90
      %s92 = sphi 0, %s90
      %s93 = sphi 0, %s92
      %s107 = sphi 0, %s93
      %s111 = sphi 0, %s111
      %s113 = sphi 0, %s111
      %s114 = sphi 0, %s113
      %s128 = sphi 0, %s114
      %s134 = sphi 0, %s136
      %s137 = sphi 0, %s134
      %s138 = sphi 0, %s137
      %s154 = sphi 0, %s138
    $region4: #{tpu_custom_call.1} parent=1 // loop_header_branch
      %17 = sbr.rel (%p15) target = $region8
    $region5: #{tpu_custom_call.1} parent=1 // loop_body
      %s19 = ssub.s32 %s14, 1
      %s20 = ssub.s32 %s14, 2
      %s21 = sadd.s32 %s14, 1
      %s22 = ssub.s32 %s14, %s21
      %p23 = scmp.eq.s32.totalorder %s22, 0
      %s25 = sadd.s32 %s24, 1
      %s26 = scalar_select %p23, %s24, %s25
      %p29 = pneg %p23
      %p30 = scmp.eq.s32.totalorder %s14, 1
      %p31 = por %p29, %p30
      %p32 = scmp.ne.s32.totalorder %s24, %s27
      %p33 = scmp.eq.s32.totalorder %s14, 0
      %p34 = por %p32, %p33
      %p35 = scmp.ne.s32.totalorder %s24, %s27
      %p36 = scmp.eq.s32.totalorder %s19, 1
      %p37 = por %p35, %p36
      %p38 = scmp.ne.s32.totalorder %s27, %s28
      %p39 = scmp.eq.s32.totalorder %s19, 0
      %p40 = por %p38, %p39
      %p41 = scmp.ne.s32.totalorder %s27, %s28
      %p42 = scmp.eq.s32.totalorder %s20, 1
      %p43 = por %p41, %p42
      %p45 = scmp.ne.s32.totalorder %s28, %s44
      %p46 = scmp.eq.s32.totalorder %s20, 0
      %p47 = por %p45, %p46
      %s49 = sadd.s32 %s48, 1
      %p52 = scmp.eq.s32.totalorder %s14, 1
      %p53 = scmp.ne.s32.totalorder %s48, %s50
      %p54 = scmp.eq.s32.totalorder %s14, 0
      %p55 = por %p53, %p54
      %p56 = scmp.ne.s32.totalorder %s48, %s50
      %p57 = scmp.eq.s32.totalorder %s19, 1
      %p58 = por %p56, %p57
      %p59 = scmp.ne.s32.totalorder %s50, %s51
      %p60 = scmp.eq.s32.totalorder %s19, 0
      %p61 = por %p59, %p60
      %p62 = scmp.ne.s32.totalorder %s50, %s51
      %p63 = scmp.eq.s32.totalorder %s20, 1
      %p64 = por %p62, %p63
      %p66 = scmp.ne.s32.totalorder %s51, %s65
      %p67 = scmp.eq.s32.totalorder %s20, 0
      %p68 = por %p66, %p67
      %s70 = sadd.s32 %s69, 1
      %p73 = scmp.eq.s32.totalorder %s14, 1
      %p74 = scmp.ne.s32.totalorder %s69, %s71
      %p75 = scmp.eq.s32.totalorder %s14, 0
      %p76 = por %p74, %p75
      %p77 = scmp.ne.s32.totalorder %s69, %s71
      %p78 = scmp.eq.s32.totalorder %s19, 1
      %p79 = por %p77, %p78
      %p80 = scmp.ne.s32.totalorder %s71, %s72
      %p81 = scmp.eq.s32.totalorder %s19, 0
      %p82 = por %p80, %p81
      %p83 = scmp.ne.s32.totalorder %s71, %s72
      %p84 = scmp.eq.s32.totalorder %s20, 1
      %p85 = por %p83, %p84
      %p87 = scmp.ne.s32.totalorder %s72, %s86
      %p88 = scmp.eq.s32.totalorder %s20, 0
      %p89 = por %p87, %p88
      %s91 = sadd.s32 %s90, 1
      %p94 = scmp.eq.s32.totalorder %s14, 1
      %p95 = scmp.ne.s32.totalorder %s90, %s92
      %p96 = scmp.eq.s32.totalorder %s14, 0
      %p97 = por %p95, %p96
      %p98 = scmp.ne.s32.totalorder %s90, %s92
      %p99 = scmp.eq.s32.totalorder %s19, 1
      %p100 = por %p98, %p99
      %p101 = scmp.ne.s32.totalorder %s92, %s93
      %p102 = scmp.eq.s32.totalorder %s19, 0
      %p103 = por %p101, %p102
      %p104 = scmp.ne.s32.totalorder %s92, %s93
      %p105 = scmp.eq.s32.totalorder %s20, 1
      %p106 = por %p104, %p105
      %p108 = scmp.ne.s32.totalorder %s93, %s107
      %p109 = scmp.eq.s32.totalorder %s20, 0
      %p110 = por %p108, %p109
      %s112 = sadd.s32 %s111, 1
      %p115 = scmp.eq.s32.totalorder %s14, 1
      %p116 = scmp.ne.s32.totalorder %s111, %s113
      %p117 = scmp.eq.s32.totalorder %s14, 0
      %p118 = por %p116, %p117
      %p119 = scmp.ne.s32.totalorder %s111, %s113
      %p120 = scmp.eq.s32.totalorder %s19, 1
      %p121 = por %p119, %p120
      %p122 = scmp.ne.s32.totalorder %s113, %s114
      %p123 = scmp.eq.s32.totalorder %s19, 0
      %p124 = por %p122, %p123
      %p125 = scmp.ne.s32.totalorder %s113, %s114
      %p126 = scmp.eq.s32.totalorder %s20, 1
      %p127 = por %p125, %p126
      %p129 = scmp.ne.s32.totalorder %s114, %s128
      %p130 = scmp.eq.s32.totalorder %s20, 0
      %p131 = por %p129, %p130
      %s132 = ssub.s32 %s14, %s21
      %p133 = scmp.eq.s32.totalorder %s132, 0
      %s135 = sadd.s32 %s134, 1
      %s136 = scalar_select %p133, %s134, %s135
      %p139 = pneg %p133
      %p140 = scmp.eq.s32.totalorder %s14, 1
      %p141 = por %p139, %p140
      %p142 = scmp.ne.s32.totalorder %s134, %s137
      %p143 = scmp.eq.s32.totalorder %s14, 0
      %p144 = por %p142, %p143
      %p145 = scmp.ne.s32.totalorder %s134, %s137
      %p146 = scmp.eq.s32.totalorder %s19, 1
      %p147 = por %p145, %p146
      %p148 = scmp.ne.s32.totalorder %s137, %s138
      %p149 = scmp.eq.s32.totalorder %s19, 0
      %p150 = por %p148, %p149
      %p151 = scmp.ne.s32.totalorder %s137, %s138
      %p152 = scmp.eq.s32.totalorder %s20, 1
      %p153 = por %p151, %p152
      %p155 = scmp.ne.s32.totalorder %s138, %s154
      %p156 = scmp.eq.s32.totalorder %s20, 0
      %p157 = por %p155, %p156
      %p158 = scmp.le.s32.totalorder 1, %s14
      %p159 = scmp.lt.s32.totalorder %s14, 3
      %p160 = pnand %p158, %p159
      %p161 = pneg %p160
      // Predicated region
      $region9: #{tpu_custom_call.1} parent=5 // pred_check
        _
      $region10: #{tpu_custom_call.1} parent=5 // pred_check_branch
        %163 = sbr.rel (%p160) target = $region12
      $region11: #{tpu_custom_call.1} parent=5 // pred_region
        %s164 = ssub.s32 %s14, 1
        // Predicated region
        $region13: #{tpu_custom_call.1} parent=11 // pred_check
          %p165 = pneg %p61
        $region14: #{tpu_custom_call.1} parent=11 // pred_check_branch
          %167 = sbr.rel (%p165) target = $region16
        $region15: #{tpu_custom_call.1} parent=11 // pred_region
          _
        $region16: #{tpu_custom_call.1} parent=11 // pred_fallthru
          _
        // Predicated region
        $region17: #{tpu_custom_call.1} parent=11 // pred_check
          %p168 = pneg %p82
        $region18: #{tpu_custom_call.1} parent=11 // pred_check_branch
          %170 = sbr.rel (%p168) target = $region20
        $region19: #{tpu_custom_call.1} parent=11 // pred_region
          _
        $region20: #{tpu_custom_call.1} parent=11 // pred_fallthru
          _
        // Predicated region
        $region21: #{tpu_custom_call.1} parent=11 // pred_check
          %p171 = pneg %p103
        $region22: #{tpu_custom_call.1} parent=11 // pred_check_branch
          %173 = sbr.rel (%p171) target = $region24
        $region23: #{tpu_custom_call.1} parent=11 // pred_region
          _
        $region24: #{tpu_custom_call.1} parent=11 // pred_fallthru
          _
        // Predicated region
        $region25: #{tpu_custom_call.1} parent=11 // pred_check
          %p174 = pneg %p124
        $region26: #{tpu_custom_call.1} parent=11 // pred_check_branch
          %176 = sbr.rel (%p174) target = $region28
        $region27: #{tpu_custom_call.1} parent=11 // pred_region
          _
        $region28: #{tpu_custom_call.1} parent=11 // pred_fallthru
          _
      $region12: #{tpu_custom_call.1} parent=5 // pred_fallthru
        _
      %p177 = scmp.lt.s32.totalorder %s14, 2
      // Predicated region
      $region29: #{tpu_custom_call.1} parent=5 // pred_check
        %p178 = pneg %p177
      $region30: #{tpu_custom_call.1} parent=5 // pred_check_branch
        %180 = sbr.rel (%p178) target = $region32
      $region31: #{tpu_custom_call.1} parent=5 // pred_region
        // Predicated region
        $region33: #{tpu_custom_call.1} parent=31 // pred_check
          %p181 = pneg %p34
        $region34: #{tpu_custom_call.1} parent=31 // pred_check_branch
          %183 = sbr.rel (%p181) target = $region36
        $region35: #{tpu_custom_call.1} parent=31 // pred_region
          %s184 = smul.u32 96, %s14
          %p185 = scmp.lt.s32.totalorder %s184, 191
          %s186 = scalar_select %p185, %s184, 191
          %s187 = smul.addr %s186, 4
          %s188 = scalar_lea.vmem %s0, %s187
          %s189 = smul.u32 96, %s14
        $region36: #{tpu_custom_call.1} parent=31 // pred_fallthru
          _
      $region32: #{tpu_custom_call.1} parent=5 // pred_fallthru
        _
      %p190 = scmp.le.s32.totalorder 1, %s14
      %p191 = scmp.lt.s32.totalorder %s14, 3
      %p192 = pnand %p190, %p191
      %p193 = pneg %p192
      // Predicated region
      $region37: #{tpu_custom_call.1} parent=5 // pred_check
        _
      $region38: #{tpu_custom_call.1} parent=5 // pred_check_branch
        %195 = sbr.rel (%p192) target = $region40
      $region39: #{tpu_custom_call.1} parent=5 // pred_region
        %s196 = ssub.s32 %s14, 1
        %s197 = smul.u32 96, %s19
        %p198 = scmp.lt.s32.totalorder %s197, 191
        %s199 = scalar_select %p198, %s197, 191
        %s200 = smul.addr %s199, 4
        %s201 = scalar_lea.vmem %s0, %s200
        %p202 = pneg %p40
        %p203 = pneg %p37
        %p204 = pneg %p61
        %p205 = pneg %p58
        %p206 = pneg %p82
        %p207 = pneg %p79
        %p208 = pneg %p103
        %p209 = pneg %p100
        %p210 = pneg %p124
        %p211 = pneg %p121
        %p212 = pneg %p150
        %p213 = pneg %p147
        %s214 = sand.u32 %s137, 1
        %s215 = scalar_lea.sflag [#allocation5], %s214
        %s216 = sand.u32 %s137, 1
        %s217 = smul.addr %s216, 4
        %s218 = scalar_lea.vmem [#allocation4], %s217
        %s219 = smul.u32 96, %s19
        %p220 = scmp.lt.s32.totalorder %s219, 191
        %s221 = scalar_select %p220, %s219, 191
        %s222 = smul.addr %s221, 4
        %s223 = scalar_lea.vmem %s0, %s222
        %s224 = smul.u32 96, %s19
        %v226 = vld [vmem:[%s223] sm:$0xf]
        %v227 = vld [vmem:[%s223 + $0x4] sm:$0xf]
        %v228 = vld [vmem:[%s223 + $0x8] sm:$0xf]
        %v229 = vld [vmem:[%s223 + $0xc] sm:$0xf]
        %v230 = vld [vmem:[%s223 + $0x10] sm:$0xf]
        %v231 = vld [vmem:[%s223 + $0x14] sm:$0xf]
        %v232 = vld [vmem:[%s223 + $0x18] sm:$0xf]
        %v233 = vld [vmem:[%s223 + $0x1c] sm:$0xf]
        %v234 = vld [vmem:[%s223 + $0x20] sm:$0xf]
        %v235 = vld [vmem:[%s223 + $0x24] sm:$0xf]
        %v236 = vld [vmem:[%s223 + $0x28] sm:$0xf]
        %v237 = vld [vmem:[%s223 + $0x2c] sm:$0xf]
        %v238 = vld [vmem:[%s223 + $0x30] sm:$0xf]
        %v239 = vld [vmem:[%s223 + $0x34] sm:$0xf]
        %v240 = vld [vmem:[%s223 + $0x38] sm:$0xf]
        %v241 = vld [vmem:[%s223 + $0x3c] sm:$0xf]
        %v242 = vld [vmem:[%s223 + $0x40] sm:$0xf]
        %v243 = vld [vmem:[%s223 + $0x44] sm:$0xf]
        %v244 = vld [vmem:[%s223 + $0x48] sm:$0xf]
        %v245 = vld [vmem:[%s223 + $0x4c] sm:$0xf]
        %v246 = vld [vmem:[%s223 + $0x50] sm:$0xf]
        %v247 = vld [vmem:[%s223 + $0x54] sm:$0xf]
        %v248 = vld [vmem:[%s223 + $0x58] sm:$0xf]
        %v249 = vld [vmem:[%s223 + $0x5c] sm:$0xf]
        %v250 = vld [vmem:[%s223 + $0x60] sm:$0xf]
        %v251 = vld [vmem:[%s223 + $0x64] sm:$0xf]
        %v252 = vld [vmem:[%s223 + $0x68] sm:$0xf]
        %v253 = vld [vmem:[%s223 + $0x6c] sm:$0xf]
        %v254 = vld [vmem:[%s223 + $0x70] sm:$0xf]
        %v255 = vld [vmem:[%s223 + $0x74] sm:$0xf]
        %v256 = vld [vmem:[%s223 + $0x78] sm:$0xf]
        %v257 = vld [vmem:[%s223 + $0x7c] sm:$0xf]
        %v258 = vld [vmem:[%s223 + $0x80] sm:$0xf]
        %v259 = vld [vmem:[%s223 + $0x84] sm:$0xf]
        %v260 = vld [vmem:[%s223 + $0x88] sm:$0xf]
        %v261 = vld [vmem:[%s223 + $0x8c] sm:$0xf]
        %v262 = vld [vmem:[%s223 + $0x90] sm:$0xf]
        %v263 = vld [vmem:[%s223 + $0x94] sm:$0xf]
        %v264 = vld [vmem:[%s223 + $0x98] sm:$0xf]
        %v265 = vld [vmem:[%s223 + $0x9c] sm:$0xf]
        %v266 = vld [vmem:[%s223 + $0xa0] sm:$0xf]
        %v267 = vld [vmem:[%s223 + $0xa4] sm:$0xf]
        %v268 = vld [vmem:[%s223 + $0xa8] sm:$0xf]
        %v269 = vld [vmem:[%s223 + $0xac] sm:$0xf]
        %v270 = vld [vmem:[%s223 + $0xb0] sm:$0xf]
        %v271 = vld [vmem:[%s223 + $0xb4] sm:$0xf]
        %v272 = vld [vmem:[%s223 + $0xb8] sm:$0xf]
        %v273 = vld [vmem:[%s223 + $0xbc] sm:$0xf]
        %v274 = vld [vmem:[%s223 + $0xc0] sm:$0xf]
        %v275 = vld [vmem:[%s223 + $0xc4] sm:$0xf]
        %v276 = vld [vmem:[%s223 + $0xc8] sm:$0xf]
        %v277 = vld [vmem:[%s223 + $0xcc] sm:$0xf]
        %v278 = vld [vmem:[%s223 + $0xd0] sm:$0xf]
        %v279 = vld [vmem:[%s223 + $0xd4] sm:$0xf]
        %v280 = vld [vmem:[%s223 + $0xd8] sm:$0xf]
        %v281 = vld [vmem:[%s223 + $0xdc] sm:$0xf]
        %v282 = vld [vmem:[%s223 + $0xe0] sm:$0xf]
        %v283 = vld [vmem:[%s223 + $0xe4] sm:$0xf]
        %v284 = vld [vmem:[%s223 + $0xe8] sm:$0xf]
        %v285 = vld [vmem:[%s223 + $0xec] sm:$0xf]
        %v286 = vld [vmem:[%s223 + $0xf0] sm:$0xf]
        %v287 = vld [vmem:[%s223 + $0xf4] sm:$0xf]
        %v288 = vld [vmem:[%s223 + $0xf8] sm:$0xf]
        %v289 = vld [vmem:[%s223 + $0xfc] sm:$0xf]
        %v290 = vld [vmem:[%s223 + $0x100] sm:$0xf]
        %v291 = vld [vmem:[%s223 + $0x104] sm:$0xf]
        %v292 = vld [vmem:[%s223 + $0x108] sm:$0xf]
        %v293 = vld [vmem:[%s223 + $0x10c] sm:$0xf]
        %v294 = vld [vmem:[%s223 + $0x110] sm:$0xf]
        %v295 = vld [vmem:[%s223 + $0x114] sm:$0xf]
        %v296 = vld [vmem:[%s223 + $0x118] sm:$0xf]
        %v297 = vld [vmem:[%s223 + $0x11c] sm:$0xf]
        %v298 = vld [vmem:[%s223 + $0x120] sm:$0xf]
        %v299 = vld [vmem:[%s223 + $0x124] sm:$0xf]
        %v300 = vld [vmem:[%s223 + $0x128] sm:$0xf]
        %v301 = vld [vmem:[%s223 + $0x12c] sm:$0xf]
        %v302 = vld [vmem:[%s223 + $0x130] sm:$0xf]
        %v303 = vld [vmem:[%s223 + $0x134] sm:$0xf]
        %v304 = vld [vmem:[%s223 + $0x138] sm:$0xf]
        %v305 = vld [vmem:[%s223 + $0x13c] sm:$0xf]
        %v306 = vld [vmem:[%s223 + $0x140] sm:$0xf]
        %v307 = vld [vmem:[%s223 + $0x144] sm:$0xf]
        %v308 = vld [vmem:[%s223 + $0x148] sm:$0xf]
        %v309 = vld [vmem:[%s223 + $0x14c] sm:$0xf]
        %v310 = vld [vmem:[%s223 + $0x150] sm:$0xf]
        %v311 = vld [vmem:[%s223 + $0x154] sm:$0xf]
        %v312 = vld [vmem:[%s223 + $0x158] sm:$0xf]
        %v313 = vld [vmem:[%s223 + $0x15c] sm:$0xf]
        %v314 = vld [vmem:[%s223 + $0x160] sm:$0xf]
        %v315 = vld [vmem:[%s223 + $0x164] sm:$0xf]
        %v316 = vld [vmem:[%s223 + $0x168] sm:$0xf]
        %v317 = vld [vmem:[%s223 + $0x16c] sm:$0xf]
        %v318 = vld [vmem:[%s223 + $0x170] sm:$0xf]
        %v319 = vld [vmem:[%s223 + $0x174] sm:$0xf]
        %v320 = vld [vmem:[%s223 + $0x178] sm:$0xf]
        %v321 = vld [vmem:[%s223 + $0x17c] sm:$0xf]
        %v322 = vld [vmem:[%s1] sm:$0xf]
        %v323 = vld [vmem:[%s1 + $0x4] sm:$0xf]
        %v324 = vld [vmem:[%s1 + $0x8] sm:$0xf]
        %v325 = vld [vmem:[%s1 + $0xc] sm:$0x3]
        %v422 = vunpack.c.l.b16 %v226
        %v423 = vunpack.c.l.b16 %v227
        %v424 = vunpack.c.l.b16 %v228
        %v425 = vunpack.c.l.b16 %v229
        %v426 = vunpack.c.l.b16 %v230
        %v427 = vunpack.c.l.b16 %v231
        %v428 = vunpack.c.l.b16 %v232
        %v429 = vunpack.c.l.b16 %v233
        %v430 = vunpack.c.l.b16 %v234
        %v431 = vunpack.c.l.b16 %v235
        %v432 = vunpack.c.l.b16 %v236
        %v433 = vunpack.c.l.b16 %v237
        %v434 = vunpack.c.l.b16 %v238
        %v435 = vunpack.c.l.b16 %v239
        %v436 = vunpack.c.l.b16 %v240
        %v437 = vunpack.c.l.b16 %v241
        %v438 = vunpack.c.l.b16 %v242
        %v439 = vunpack.c.l.b16 %v243
        %v440 = vunpack.c.l.b16 %v244
        %v441 = vunpack.c.l.b16 %v245
        %v442 = vunpack.c.l.b16 %v246
        %v443 = vunpack.c.l.b16 %v247
        %v444 = vunpack.c.l.b16 %v248
        %v445 = vunpack.c.l.b16 %v249
        %v446 = vunpack.c.l.b16 %v250
        %v447 = vunpack.c.l.b16 %v251
        %v448 = vunpack.c.l.b16 %v252
        %v449 = vunpack.c.l.b16 %v253
        %v450 = vunpack.c.l.b16 %v254
        %v451 = vunpack.c.l.b16 %v255
        %v452 = vunpack.c.l.b16 %v256
        %v453 = vunpack.c.l.b16 %v257
        %v454 = vunpack.c.l.b16 %v258
        %v455 = vunpack.c.l.b16 %v259
        %v456 = vunpack.c.l.b16 %v260
        %v457 = vunpack.c.l.b16 %v261
        %v458 = vunpack.c.l.b16 %v262
        %v459 = vunpack.c.l.b16 %v263
        %v460 = vunpack.c.l.b16 %v264
        %v461 = vunpack.c.l.b16 %v265
        %v462 = vunpack.c.l.b16 %v266
        %v463 = vunpack.c.l.b16 %v267
        %v464 = vunpack.c.l.b16 %v268
        %v465 = vunpack.c.l.b16 %v269
        %v466 = vunpack.c.l.b16 %v270
        %v467 = vunpack.c.l.b16 %v271
        %v468 = vunpack.c.l.b16 %v272
        %v469 = vunpack.c.l.b16 %v273
        %v470 = vunpack.c.l.b16 %v274
        %v471 = vunpack.c.l.b16 %v275
        %v472 = vunpack.c.l.b16 %v276
        %v473 = vunpack.c.l.b16 %v277
        %v474 = vunpack.c.l.b16 %v278
        %v475 = vunpack.c.l.b16 %v279
        %v476 = vunpack.c.l.b16 %v280
        %v477 = vunpack.c.l.b16 %v281
        %v478 = vunpack.c.l.b16 %v282
        %v479 = vunpack.c.l.b16 %v283
        %v480 = vunpack.c.l.b16 %v284
        %v481 = vunpack.c.l.b16 %v285
        %v482 = vunpack.c.l.b16 %v286
        %v483 = vunpack.c.l.b16 %v287
        %v484 = vunpack.c.l.b16 %v288
        %v485 = vunpack.c.l.b16 %v289
        %v486 = vunpack.c.l.b16 %v290
        %v487 = vunpack.c.l.b16 %v291
        %v488 = vunpack.c.l.b16 %v292
        %v489 = vunpack.c.l.b16 %v293
        %v490 = vunpack.c.l.b16 %v294
        %v491 = vunpack.c.l.b16 %v295
        %v492 = vunpack.c.l.b16 %v296
        %v493 = vunpack.c.l.b16 %v297
        %v494 = vunpack.c.l.b16 %v298
        %v495 = vunpack.c.l.b16 %v299
        %v496 = vunpack.c.l.b16 %v300
        %v497 = vunpack.c.l.b16 %v301
        %v498 = vunpack.c.l.b16 %v302
        %v499 = vunpack.c.l.b16 %v303
        %v500 = vunpack.c.l.b16 %v304
        %v501 = vunpack.c.l.b16 %v305
        %v502 = vunpack.c.l.b16 %v306
        %v503 = vunpack.c.l.b16 %v307
        %v504 = vunpack.c.l.b16 %v308
        %v505 = vunpack.c.l.b16 %v309
        %v506 = vunpack.c.l.b16 %v310
        %v507 = vunpack.c.l.b16 %v311
        %v508 = vunpack.c.l.b16 %v312
        %v509 = vunpack.c.l.b16 %v313
        %v510 = vunpack.c.l.b16 %v314
        %v511 = vunpack.c.l.b16 %v315
        %v512 = vunpack.c.l.b16 %v316
        %v513 = vunpack.c.l.b16 %v317
        %v514 = vunpack.c.l.b16 %v318
        %v515 = vunpack.c.l.b16 %v319
        %v516 = vunpack.c.l.b16 %v320
        %v517 = vunpack.c.l.b16 %v321
        %v518 = vpack.c.b16 %v423, %v422
        %v519 = vpack.c.b16 %v425, %v424
        %v520 = vpack.c.b16 %v427, %v426
        %v521 = vpack.c.b16 %v429, %v428
        %v522 = vpack.c.b16 %v431, %v430
        %v523 = vpack.c.b16 %v433, %v432
        %v524 = vpack.c.b16 %v435, %v434
        %v525 = vpack.c.b16 %v437, %v436
        %v526 = vpack.c.b16 %v439, %v438
        %v527 = vpack.c.b16 %v441, %v440
        %v528 = vpack.c.b16 %v443, %v442
        %v529 = vpack.c.b16 %v445, %v444
        %v530 = vpack.c.b16 %v447, %v446
        %v531 = vpack.c.b16 %v449, %v448
        %v532 = vpack.c.b16 %v451, %v450
        %v533 = vpack.c.b16 %v453, %v452
        %v534 = vpack.c.b16 %v455, %v454
        %v535 = vpack.c.b16 %v457, %v456
        %v536 = vpack.c.b16 %v459, %v458
        %v537 = vpack.c.b16 %v461, %v460
        %v538 = vpack.c.b16 %v463, %v462
        %v539 = vpack.c.b16 %v465, %v464
        %v540 = vpack.c.b16 %v467, %v466
        %v541 = vpack.c.b16 %v469, %v468
        %v542 = vpack.c.b16 %v471, %v470
        %v543 = vpack.c.b16 %v473, %v472
        %v544 = vpack.c.b16 %v475, %v474
        %v545 = vpack.c.b16 %v477, %v476
        %v546 = vpack.c.b16 %v479, %v478
        %v547 = vpack.c.b16 %v481, %v480
        %v548 = vpack.c.b16 %v483, %v482
        %v549 = vpack.c.b16 %v485, %v484
        %v550 = vpack.c.b16 %v487, %v486
        %v551 = vpack.c.b16 %v489, %v488
        %v552 = vpack.c.b16 %v491, %v490
        %v553 = vpack.c.b16 %v493, %v492
        %v554 = vpack.c.b16 %v495, %v494
        %v555 = vpack.c.b16 %v497, %v496
        %v556 = vpack.c.b16 %v499, %v498
        %v557 = vpack.c.b16 %v501, %v500
        %v558 = vpack.c.b16 %v503, %v502
        %v559 = vpack.c.b16 %v505, %v504
        %v560 = vpack.c.b16 %v507, %v506
        %v561 = vpack.c.b16 %v509, %v508
        %v562 = vpack.c.b16 %v511, %v510
        %v563 = vpack.c.b16 %v513, %v512
        %v564 = vpack.c.b16 %v515, %v514
        %v565 = vpack.c.b16 %v517, %v516
        %v570 = vunpack.c.l.b16 %v322
        %v571 = vunpack.c.l.b16 %v323
        %v572 = vunpack.c.l.b16 %v324
        %v573 = vunpack.c.l.b16 %v325
        %v574 = vpack.c.b16 %v571, %v570
        %v575 = vpack.c.b16 %v573, %v572
        %vm577 = vcmask 220160
        %v579 = vsel %vm577, %v518, 0
        %v582 = vsel %vm577, %v519, 0
        %v585 = vsel %vm577, %v520, 0
        %v588 = vsel %vm577, %v521, 0
        %v591 = vsel %vm577, %v522, 0
        %v594 = vsel %vm577, %v523, 0
        %v597 = vsel %vm577, %v524, 0
        %v600 = vsel %vm577, %v525, 0
        %v603 = vsel %vm577, %v526, 0
        %v606 = vsel %vm577, %v527, 0
        %v609 = vsel %vm577, %v528, 0
        %v612 = vsel %vm577, %v529, 0
        %v615 = vsel %vm577, %v530, 0
        %v618 = vsel %vm577, %v531, 0
        %v621 = vsel %vm577, %v532, 0
        %v624 = vsel %vm577, %v533, 0
        %v627 = vsel %vm577, %v534, 0
        %v630 = vsel %vm577, %v535, 0
        %v633 = vsel %vm577, %v536, 0
        %v636 = vsel %vm577, %v537, 0
        %v639 = vsel %vm577, %v538, 0
        %v642 = vsel %vm577, %v539, 0
        %v645 = vsel %vm577, %v540, 0
        %v648 = vsel %vm577, %v541, 0
        %v651 = vsel %vm577, %v542, 0
        %v654 = vsel %vm577, %v543, 0
        %v657 = vsel %vm577, %v544, 0
        %v660 = vsel %vm577, %v545, 0
        %v663 = vsel %vm577, %v546, 0
        %v666 = vsel %vm577, %v547, 0
        %v669 = vsel %vm577, %v548, 0
        %v672 = vsel %vm577, %v549, 0
        %v675 = vsel %vm577, %v550, 0
        %v678 = vsel %vm577, %v551, 0
        %v681 = vsel %vm577, %v552, 0
        %v684 = vsel %vm577, %v553, 0
        %v687 = vsel %vm577, %v554, 0
        %v690 = vsel %vm577, %v555, 0
        %v693 = vsel %vm577, %v556, 0
        %v696 = vsel %vm577, %v557, 0
        %v699 = vsel %vm577, %v558, 0
        %v702 = vsel %vm577, %v559, 0
        %v705 = vsel %vm577, %v560, 0
        %v708 = vsel %vm577, %v561, 0
        %v711 = vsel %vm577, %v562, 0
        %v714 = vsel %vm577, %v563, 0
        %v717 = vsel %vm577, %v564, 0
        %v720 = vsel %vm577, %v565, 0
        %vm722 = vcmask 1044480
        %vm723 = vcmask 1045504
        %v724 = vsel %vm722, 4294967295, 65535
        %v725 = vsel %vm723, %v724, 0
        %v727 = vand.u32 %v575, %v725
        %729 = vmatprep.subr.bf16.mxu0 0
        %730 = vmatpush1.bf16.msra.mxu0 %v574
        %731 = vmatprep.subr.bf16.mxu0 0
        %732 = vmatpush1.bf16.msra.mxu0 %v727
        %733 = vmatprep.subr.bf16.mxu0 0
        %734 = vmatpush1.bf16.msra.mxu0 0
        %735 = vmatprep.subr.bf16.mxu0 0
        %736 = vmatpush1.bf16.msra.mxu0 0
        %737 = vmatprep.subr.bf16.mxu0 0
        %738 = vmatpush1.bf16.msra.mxu0 0
        %739 = vmatprep.subr.bf16.mxu0 0
        %740 = vmatpush1.bf16.msra.mxu0 0
        %741 = vmatprep.subr.bf16.mxu0 0
        %742 = vmatpush1.bf16.msra.mxu0 0
        %743 = vmatprep.subr.bf16.mxu0 0
        %744 = vmatpush1.bf16.msra.mxu0 0
        %745 = vmatprep.subr.bf16.mxu0 0
        %746 = vmatpush1.bf16.msra.mxu0 0
        %747 = vmatprep.subr.bf16.mxu0 0
        %748 = vmatpush1.bf16.msra.mxu0 0
        %749 = vmatprep.subr.bf16.mxu0 0
        %750 = vmatpush1.bf16.msra.mxu0 0
        %751 = vmatprep.subr.bf16.mxu0 0
        %752 = vmatpush1.bf16.msra.mxu0 0
        %753 = vmatprep.subr.bf16.mxu0 0
        %754 = vmatpush1.bf16.msra.mxu0 0
        %755 = vmatprep.subr.bf16.mxu0 0
        %756 = vmatpush1.bf16.msra.mxu0 0
        %757 = vmatprep.subr.bf16.mxu0 0
        %758 = vmatpush1.bf16.msra.mxu0 0
        %759 = vmatprep.subr.bf16.mxu0 0
        %760 = vmatpush1.bf16.msra.mxu0 0
        %761 = vmatprep.mubr.bf16.mxu0 0
        %762 = vmatmul.mubr.bf16.gmra.mrb[0].mxu0 %v579
        %v763 = vpop.f32.mrb[0].mxu0
        %v764 = vadd.f32 0.0, %v763
        %v765 = vpop.f32.mrb[0].mxu0
        %v766 = vpop.f32.mrb[0].mxu0
        %v767 = vadd.f32 0.0, %v766
        %v768 = vpop.f32.mrb[0].mxu0
        %769 = vmatprep.mubr.bf16.mxu0 0
        %770 = vmatmul.mubr.bf16.gmra.mrb[0].mxu0 %v582
        %v771 = vpop.f32.mrb[0].mxu0
        %v772 = vadd.f32 0.0, %v771
        %v773 = vpop.f32.mrb[0].mxu0
        %v774 = vpop.f32.mrb[0].mxu0
        %v775 = vadd.f32 0.0, %v774
        %v776 = vpop.f32.mrb[0].mxu0
        %777 = vmatprep.mubr.bf16.mxu0 0
        %778 = vmatmul.mubr.bf16.gmra.mrb[0].mxu0 %v585
        %v779 = vpop.f32.mrb[0].mxu0
        %v780 = vadd.f32 0.0, %v779
        %v781 = vpop.f32.mrb[0].mxu0
        %v782 = vpop.f32.mrb[0].mxu0
        %v783 = vadd.f32 0.0, %v782
        %v784 = vpop.f32.mrb[0].mxu0
        %785 = vmatprep.mubr.bf16.mxu0 0
        %786 = vmatmul.mubr.bf16.gmra.mrb[0].mxu0 %v588
        %v787 = vpop.f32.mrb[0].mxu0
        %v788 = vadd.f32 0.0, %v787
        %v789 = vpop.f32.mrb[0].mxu0
        %v790 = vpop.f32.mrb[0].mxu0
        %v791 = vadd.f32 0.0, %v790
        %v792 = vpop.f32.mrb[0].mxu0
        %793 = vmatprep.mubr.bf16.mxu0 0
        %794 = vmatmul.mubr.bf16.gmra.mrb[0].mxu0 %v591
        %v795 = vpop.f32.mrb[0].mxu0
        %v796 = vadd.f32 0.0, %v795
        %v797 = vpop.f32.mrb[0].mxu0
        %v798 = vpop.f32.mrb[0].mxu0
        %v799 = vadd.f32 0.0, %v798
        %v800 = vpop.f32.mrb[0].mxu0
        %801 = vmatprep.mubr.bf16.mxu0 0
        %802 = vmatmul.mubr.bf16.gmra.mrb[0].mxu0 %v594
        %v803 = vpop.f32.mrb[0].mxu0
        %v804 = vadd.f32 0.0, %v803
        %v805 = vpop.f32.mrb[0].mxu0
        %v806 = vpop.f32.mrb[0].mxu0
        %v807 = vadd.f32 0.0, %v806
        %v808 = vpop.f32.mrb[0].mxu0
        %809 = vmatprep.mubr.bf16.mxu0 0
        %810 = vmatmul.mubr.bf16.gmra.mrb[0].mxu0 %v597
        %v811 = vpop.f32.mrb[0].mxu0
        %v812 = vadd.f32 0.0, %v811
        %v813 = vpop.f32.mrb[0].mxu0
        %v814 = vpop.f32.mrb[0].mxu0
        %v815 = vadd.f32 0.0, %v814
        %v816 = vpop.f32.mrb[0].mxu0
        %817 = vmatprep.mubr.bf16.mxu0 0
        %818 = vmatmul.mubr.bf16.gmra.mrb[0].mxu0 %v600
        %v819 = vpop.f32.mrb[0].mxu0
        %v820 = vadd.f32 0.0, %v819
        %v821 = vpop.f32.mrb[0].mxu0
        %v822 = vpop.f32.mrb[0].mxu0
        %v823 = vadd.f32 0.0, %v822
        %v824 = vpop.f32.mrb[0].mxu0
        %825 = vmatprep.mubr.bf16.mxu0 0
        %826 = vmatmul.mubr.bf16.gmra.mrb[0].mxu0 %v603
        %v827 = vpop.f32.mrb[0].mxu0
        %v828 = vadd.f32 0.0, %v827
        %v829 = vpop.f32.mrb[0].mxu0
        %v830 = vpop.f32.mrb[0].mxu0
        %v831 = vadd.f32 0.0, %v830
        %v832 = vpop.f32.mrb[0].mxu0
        %833 = vmatprep.mubr.bf16.mxu0 0
        %834 = vmatmul.mubr.bf16.gmra.mrb[0].mxu0 %v606
        %v835 = vpop.f32.mrb[0].mxu0
        %v836 = vadd.f32 0.0, %v835
        %v837 = vpop.f32.mrb[0].mxu0
        %v838 = vpop.f32.mrb[0].mxu0
        %v839 = vadd.f32 0.0, %v838
        %v840 = vpop.f32.mrb[0].mxu0
        %841 = vmatprep.mubr.bf16.mxu0 0
        %842 = vmatmul.mubr.bf16.gmra.mrb[0].mxu0 %v609
        %v843 = vpop.f32.mrb[0].mxu0
        %v844 = vadd.f32 0.0, %v843
        %v845 = vpop.f32.mrb[0].mxu0
        %v846 = vpop.f32.mrb[0].mxu0
        %v847 = vadd.f32 0.0, %v846
        %v848 = vpop.f32.mrb[0].mxu0
        %849 = vmatprep.mubr.bf16.mxu0 0
        %850 = vmatmul.mubr.bf16.gmra.mrb[0].mxu0 %v612
        %v851 = vpop.f32.mrb[0].mxu0
        %v852 = vadd.f32 0.0, %v851
        %v853 = vpop.f32.mrb[0].mxu0
        %v854 = vpop.f32.mrb[0].mxu0
        %v855 = vadd.f32 0.0, %v854
        %v856 = vpop.f32.mrb[0].mxu0
        %857 = vmatprep.mubr.bf16.mxu0 0
        %858 = vmatmul.mubr.bf16.gmra.mrb[0].mxu0 %v615
        %v859 = vpop.f32.mrb[0].mxu0
        %v860 = vadd.f32 0.0, %v859
        %v861 = vpop.f32.mrb[0].mxu0
        %v862 = vpop.f32.mrb[0].mxu0
        %v863 = vadd.f32 0.0, %v862
        %v864 = vpop.f32.mrb[0].mxu0
        %865 = vmatprep.mubr.bf16.mxu0 0
        %866 = vmatmul.mubr.bf16.gmra.mrb[0].mxu0 %v618
        %v867 = vpop.f32.mrb[0].mxu0
        %v868 = vadd.f32 0.0, %v867
        %v869 = vpop.f32.mrb[0].mxu0
        %v870 = vpop.f32.mrb[0].mxu0
        %v871 = vadd.f32 0.0, %v870
        %v872 = vpop.f32.mrb[0].mxu0
        %873 = vmatprep.mubr.bf16.mxu0 0
        %874 = vmatmul.mubr.bf16.gmra.mrb[0].mxu0 %v621
        %v875 = vpop.f32.mrb[0].mxu0
        %v876 = vadd.f32 0.0, %v875
        %v877 = vpop.f32.mrb[0].mxu0
        %v878 = vpop.f32.mrb[0].mxu0
        %v879 = vadd.f32 0.0, %v878
        %v880 = vpop.f32.mrb[0].mxu0
        %881 = vmatprep.mubr.bf16.mxu0 0
        %882 = vmatmul.mubr.bf16.gmra.mrb[0].mxu0 %v624
        %v883 = vpop.f32.mrb[0].mxu0
        %v884 = vadd.f32 0.0, %v883
        %v885 = vpop.f32.mrb[0].mxu0
        %v886 = vpop.f32.mrb[0].mxu0
        %v887 = vadd.f32 0.0, %v886
        %v888 = vpop.f32.mrb[0].mxu0
        %889 = vmatprep.mubr.bf16.mxu0 0
        %890 = vmatmul.mubr.bf16.gmra.mrb[0].mxu0 %v627
        %v891 = vpop.f32.mrb[0].mxu0
        %v892 = vadd.f32 0.0, %v891
        %v893 = vpop.f32.mrb[0].mxu0
        %v894 = vpop.f32.mrb[0].mxu0
        %v895 = vadd.f32 0.0, %v894
        %v896 = vpop.f32.mrb[0].mxu0
        %897 = vmatprep.mubr.bf16.mxu0 0
        %898 = vmatmul.mubr.bf16.gmra.mrb[0].mxu0 %v630
        %v899 = vpop.f32.mrb[0].mxu0
        %v900 = vadd.f32 0.0, %v899
        %v901 = vpop.f32.mrb[0].mxu0
        %v902 = vpop.f32.mrb[0].mxu0
        %v903 = vadd.f32 0.0, %v902
        %v904 = vpop.f32.mrb[0].mxu0
        %905 = vmatprep.mubr.bf16.mxu0 0
        %906 = vmatmul.mubr.bf16.gmra.mrb[0].mxu0 %v633
        %v907 = vpop.f32.mrb[0].mxu0
        %v908 = vadd.f32 0.0, %v907
        %v909 = vpop.f32.mrb[0].mxu0
        %v910 = vpop.f32.mrb[0].mxu0
        %v911 = vadd.f32 0.0, %v910
        %v912 = vpop.f32.mrb[0].mxu0
        %913 = vmatprep.mubr.bf16.mxu0 0
        %914 = vmatmul.mubr.bf16.gmra.mrb[0].mxu0 %v636
        %v915 = vpop.f32.mrb[0].mxu0
        %v916 = vadd.f32 0.0, %v915
        %v917 = vpop.f32.mrb[0].mxu0
        %v918 = vpop.f32.mrb[0].mxu0
        %v919 = vadd.f32 0.0, %v918
        %v920 = vpop.f32.mrb[0].mxu0
        %921 = vmatprep.mubr.bf16.mxu0 0
        %922 = vmatmul.mubr.bf16.gmra.mrb[0].mxu0 %v639
        %v923 = vpop.f32.mrb[0].mxu0
        %v924 = vadd.f32 0.0, %v923
        %v925 = vpop.f32.mrb[0].mxu0
        %v926 = vpop.f32.mrb[0].mxu0
        %v927 = vadd.f32 0.0, %v926
        %v928 = vpop.f32.mrb[0].mxu0
        %929 = vmatprep.mubr.bf16.mxu0 0
        %930 = vmatmul.mubr.bf16.gmra.mrb[0].mxu0 %v642
        %v931 = vpop.f32.mrb[0].mxu0
        %v932 = vadd.f32 0.0, %v931
        %v933 = vpop.f32.mrb[0].mxu0
        %v934 = vpop.f32.mrb[0].mxu0
        %v935 = vadd.f32 0.0, %v934
        %v936 = vpop.f32.mrb[0].mxu0
        %937 = vmatprep.mubr.bf16.mxu0 0
        %938 = vmatmul.mubr.bf16.gmra.mrb[0].mxu0 %v645
        %v939 = vpop.f32.mrb[0].mxu0
        %v940 = vadd.f32 0.0, %v939
        %v941 = vpop.f32.mrb[0].mxu0
        %v942 = vpop.f32.mrb[0].mxu0
        %v943 = vadd.f32 0.0, %v942
        %v944 = vpop.f32.mrb[0].mxu0
        %945 = vmatprep.mubr.bf16.mxu0 0
        %946 = vmatmul.mubr.bf16.gmra.mrb[0].mxu0 %v648
        %v947 = vpop.f32.mrb[0].mxu0
        %v948 = vadd.f32 0.0, %v947
        %v949 = vpop.f32.mrb[0].mxu0
        %v950 = vpop.f32.mrb[0].mxu0
        %v951 = vadd.f32 0.0, %v950
        %v952 = vpop.f32.mrb[0].mxu0
        %953 = vmatprep.mubr.bf16.mxu0 0
        %954 = vmatmul.mubr.bf16.gmra.mrb[0].mxu0 %v651
        %v955 = vpop.f32.mrb[0].mxu0
        %v956 = vadd.f32 0.0, %v955
        %v957 = vpop.f32.mrb[0].mxu0
        %v958 = vpop.f32.mrb[0].mxu0
        %v959 = vadd.f32 0.0, %v958
        %v960 = vpop.f32.mrb[0].mxu0
        %961 = vmatprep.mubr.bf16.mxu0 0
        %962 = vmatmul.mubr.bf16.gmra.mrb[0].mxu0 %v654
        %v963 = vpop.f32.mrb[0].mxu0
        %v964 = vadd.f32 0.0, %v963
        %v965 = vpop.f32.mrb[0].mxu0
        %v966 = vpop.f32.mrb[0].mxu0
        %v967 = vadd.f32 0.0, %v966
        %v968 = vpop.f32.mrb[0].mxu0
        %969 = vmatprep.mubr.bf16.mxu0 0
        %970 = vmatmul.mubr.bf16.gmra.mrb[0].mxu0 %v657
        %v971 = vpop.f32.mrb[0].mxu0
        %v972 = vadd.f32 0.0, %v971
        %v973 = vpop.f32.mrb[0].mxu0
        %v974 = vpop.f32.mrb[0].mxu0
        %v975 = vadd.f32 0.0, %v974
        %v976 = vpop.f32.mrb[0].mxu0
        %977 = vmatprep.mubr.bf16.mxu0 0
        %978 = vmatmul.mubr.bf16.gmra.mrb[0].mxu0 %v660
        %v979 = vpop.f32.mrb[0].mxu0
        %v980 = vadd.f32 0.0, %v979
        %v981 = vpop.f32.mrb[0].mxu0
        %v982 = vpop.f32.mrb[0].mxu0
        %v983 = vadd.f32 0.0, %v982
        %v984 = vpop.f32.mrb[0].mxu0
        %985 = vmatprep.mubr.bf16.mxu0 0
        %986 = vmatmul.mubr.bf16.gmra.mrb[0].mxu0 %v663
        %v987 = vpop.f32.mrb[0].mxu0
        %v988 = vadd.f32 0.0, %v987
        %v989 = vpop.f32.mrb[0].mxu0
        %v990 = vpop.f32.mrb[0].mxu0
        %v991 = vadd.f32 0.0, %v990
        %v992 = vpop.f32.mrb[0].mxu0
        %993 = vmatprep.mubr.bf16.mxu0 0
        %994 = vmatmul.mubr.bf16.gmra.mrb[0].mxu0 %v666
        %v995 = vpop.f32.mrb[0].mxu0
        %v996 = vadd.f32 0.0, %v995
        %v997 = vpop.f32.mrb[0].mxu0
        %v998 = vpop.f32.mrb[0].mxu0
        %v999 = vadd.f32 0.0, %v998
        %v1000 = vpop.f32.mrb[0].mxu0
        %1001 = vmatprep.mubr.bf16.mxu0 0
        %1002 = vmatmul.mubr.bf16.gmra.mrb[0].mxu0 %v669
        %v1003 = vpop.f32.mrb[0].mxu0
        %v1004 = vadd.f32 0.0, %v1003
        %v1005 = vpop.f32.mrb[0].mxu0
        %v1006 = vpop.f32.mrb[0].mxu0
        %v1007 = vadd.f32 0.0, %v1006
        %v1008 = vpop.f32.mrb[0].mxu0
        %1009 = vmatprep.mubr.bf16.mxu0 0
        %1010 = vmatmul.mubr.bf16.gmra.mrb[0].mxu0 %v672
        %v1011 = vpop.f32.mrb[0].mxu0
        %v1012 = vadd.f32 0.0, %v1011
        %v1013 = vpop.f32.mrb[0].mxu0
        %v1014 = vpop.f32.mrb[0].mxu0
        %v1015 = vadd.f32 0.0, %v1014
        %v1016 = vpop.f32.mrb[0].mxu0
        %1017 = vmatprep.mubr.bf16.mxu0 0
        %1018 = vmatmul.mubr.bf16.gmra.mrb[0].mxu0 %v675
        %v1019 = vpop.f32.mrb[0].mxu0
        %v1020 = vadd.f32 0.0, %v1019
        %v1021 = vpop.f32.mrb[0].mxu0
        %v1022 = vpop.f32.mrb[0].mxu0
        %v1023 = vadd.f32 0.0, %v1022
        %v1024 = vpop.f32.mrb[0].mxu0
        %1025 = vmatprep.mubr.bf16.mxu0 0
        %1026 = vmatmul.mubr.bf16.gmra.mrb[0].mxu0 %v678
        %v1027 = vpop.f32.mrb[0].mxu0
        %v1028 = vadd.f32 0.0, %v1027
        %v1029 = vpop.f32.mrb[0].mxu0
        %v1030 = vpop.f32.mrb[0].mxu0
        %v1031 = vadd.f32 0.0, %v1030
        %v1032 = vpop.f32.mrb[0].mxu0
        %1033 = vmatprep.mubr.bf16.mxu0 0
        %1034 = vmatmul.mubr.bf16.gmra.mrb[0].mxu0 %v681
        %v1035 = vpop.f32.mrb[0].mxu0
        %v1036 = vadd.f32 0.0, %v1035
        %v1037 = vpop.f32.mrb[0].mxu0
        %v1038 = vpop.f32.mrb[0].mxu0
        %v1039 = vadd.f32 0.0, %v1038
        %v1040 = vpop.f32.mrb[0].mxu0
        %1041 = vmatprep.mubr.bf16.mxu0 0
        %1042 = vmatmul.mubr.bf16.gmra.mrb[0].mxu0 %v684
        %v1043 = vpop.f32.mrb[0].mxu0
        %v1044 = vadd.f32 0.0, %v1043
        %v1045 = vpop.f32.mrb[0].mxu0
        %v1046 = vpop.f32.mrb[0].mxu0
        %v1047 = vadd.f32 0.0, %v1046
        %v1048 = vpop.f32.mrb[0].mxu0
        %1049 = vmatprep.mubr.bf16.mxu0 0
        %1050 = vmatmul.mubr.bf16.gmra.mrb[0].mxu0 %v687
        %v1051 = vpop.f32.mrb[0].mxu0
        %v1052 = vadd.f32 0.0, %v1051
        %v1053 = vpop.f32.mrb[0].mxu0
        %v1054 = vpop.f32.mrb[0].mxu0
        %v1055 = vadd.f32 0.0, %v1054
        %v1056 = vpop.f32.mrb[0].mxu0
        %1057 = vmatprep.mubr.bf16.mxu0 0
        %1058 = vmatmul.mubr.bf16.gmra.mrb[0].mxu0 %v690
        %v1059 = vpop.f32.mrb[0].mxu0
        %v1060 = vadd.f32 0.0, %v1059
        %v1061 = vpop.f32.mrb[0].mxu0
        %v1062 = vpop.f32.mrb[0].mxu0
        %v1063 = vadd.f32 0.0, %v1062
        %v1064 = vpop.f32.mrb[0].mxu0
        %1065 = vmatprep.mubr.bf16.mxu0 0
        %1066 = vmatmul.mubr.bf16.gmra.mrb[0].mxu0 %v693
        %v1067 = vpop.f32.mrb[0].mxu0
        %v1068 = vadd.f32 0.0, %v1067
        %v1069 = vpop.f32.mrb[0].mxu0
        %v1070 = vpop.f32.mrb[0].mxu0
        %v1071 = vadd.f32 0.0, %v1070
        %v1072 = vpop.f32.mrb[0].mxu0
        %1073 = vmatprep.mubr.bf16.mxu0 0
        %1074 = vmatmul.mubr.bf16.gmra.mrb[0].mxu0 %v696
        %v1075 = vpop.f32.mrb[0].mxu0
        %v1076 = vadd.f32 0.0, %v1075
        %v1077 = vpop.f32.mrb[0].mxu0
        %v1078 = vpop.f32.mrb[0].mxu0
        %v1079 = vadd.f32 0.0, %v1078
        %v1080 = vpop.f32.mrb[0].mxu0
        %1081 = vmatprep.mubr.bf16.mxu0 0
        %1082 = vmatmul.mubr.bf16.gmra.mrb[0].mxu0 %v699
        %v1083 = vpop.f32.mrb[0].mxu0
        %v1084 = vadd.f32 0.0, %v1083
        %v1085 = vpop.f32.mrb[0].mxu0
        %v1086 = vpop.f32.mrb[0].mxu0
        %v1087 = vadd.f32 0.0, %v1086
        %v1088 = vpop.f32.mrb[0].mxu0
        %1089 = vmatprep.mubr.bf16.mxu0 0
        %1090 = vmatmul.mubr.bf16.gmra.mrb[0].mxu0 %v702
        %v1091 = vpop.f32.mrb[0].mxu0
        %v1092 = vadd.f32 0.0, %v1091
        %v1093 = vpop.f32.mrb[0].mxu0
        %v1094 = vpop.f32.mrb[0].mxu0
        %v1095 = vadd.f32 0.0, %v1094
        %v1096 = vpop.f32.mrb[0].mxu0
        %1097 = vmatprep.mubr.bf16.mxu0 0
        %1098 = vmatmul.mubr.bf16.gmra.mrb[0].mxu0 %v705
        %v1099 = vpop.f32.mrb[0].mxu0
        %v1100 = vadd.f32 0.0, %v1099
        %v1101 = vpop.f32.mrb[0].mxu0
        %v1102 = vpop.f32.mrb[0].mxu0
        %v1103 = vadd.f32 0.0, %v1102
        %v1104 = vpop.f32.mrb[0].mxu0
        %1105 = vmatprep.mubr.bf16.mxu0 0
        %1106 = vmatmul.mubr.bf16.gmra.mrb[0].mxu0 %v708
        %v1107 = vpop.f32.mrb[0].mxu0
        %v1108 = vadd.f32 0.0, %v1107
        %v1109 = vpop.f32.mrb[0].mxu0
        %v1110 = vpop.f32.mrb[0].mxu0
        %v1111 = vadd.f32 0.0, %v1110
        %v1112 = vpop.f32.mrb[0].mxu0
        %1113 = vmatprep.mubr.bf16.mxu0 0
        %1114 = vmatmul.mubr.bf16.gmra.mrb[0].mxu0 %v711
        %v1115 = vpop.f32.mrb[0].mxu0
        %v1116 = vadd.f32 0.0, %v1115
        %v1117 = vpop.f32.mrb[0].mxu0
        %v1118 = vpop.f32.mrb[0].mxu0
        %v1119 = vadd.f32 0.0, %v1118
        %v1120 = vpop.f32.mrb[0].mxu0
        %1121 = vmatprep.mubr.bf16.mxu0 0
        %1122 = vmatmul.mubr.bf16.gmra.mrb[0].mxu0 %v714
        %v1123 = vpop.f32.mrb[0].mxu0
        %v1124 = vadd.f32 0.0, %v1123
        %v1125 = vpop.f32.mrb[0].mxu0
        %v1126 = vpop.f32.mrb[0].mxu0
        %v1127 = vadd.f32 0.0, %v1126
        %v1128 = vpop.f32.mrb[0].mxu0
        %1129 = vmatprep.mubr.bf16.mxu0 0
        %1130 = vmatmul.mubr.bf16.gmra.mrb[0].mxu0 %v717
        %v1131 = vpop.f32.mrb[0].mxu0
        %v1132 = vadd.f32 0.0, %v1131
        %v1133 = vpop.f32.mrb[0].mxu0
        %v1134 = vpop.f32.mrb[0].mxu0
        %v1135 = vadd.f32 0.0, %v1134
        %v1136 = vpop.f32.mrb[0].mxu0
        %1137 = vmatprep.mubr.bf16.mxu0 0
        %1138 = vmatmul.mubr.bf16.gmra.mrb[0].mxu0 %v720
        %v1139 = vpop.f32.mrb[0].mxu0
        %v1140 = vadd.f32 0.0, %v1139
        %v1141 = vpop.f32.mrb[0].mxu0
        %v1142 = vpop.f32.mrb[0].mxu0
        %v1143 = vadd.f32 0.0, %v1142
        %v1144 = vpop.f32.mrb[0].mxu0
        %1145 = vdwg.mxu0
        %v1146 = vlaneseq
        %v1147 = vshrl.u32 %v1146, 7
        %v1148 = vadd.s32 %v1147, 8
        %v1149 = vadd.s32 %v1147, 16
        %v1150 = vadd.s32 %v1147, 24
        %v1151 = vadd.s32 %v1147, 32
        %v1152 = vadd.s32 %v1147, 40
        %v1153 = vadd.s32 %v1147, 48
        %v1154 = vadd.s32 %v1147, 56
        %v1155 = vadd.s32 %v1147, 64
        %v1156 = vadd.s32 %v1147, 72
        %v1157 = vadd.s32 %v1147, 80
        %v1158 = vadd.s32 %v1147, 88
        %v1159 = vadd.s32 %v1147, 96
        %v1160 = vadd.s32 %v1147, 104
        %v1161 = vadd.s32 %v1147, 112
        %v1162 = vadd.s32 %v1147, 120
        %v1163 = vadd.s32 %v1147, 128
        %v1164 = vadd.s32 %v1147, 136
        %v1165 = vadd.s32 %v1147, 144
        %v1166 = vadd.s32 %v1147, 152
        %v1167 = vadd.s32 %v1147, 160
        %v1168 = vadd.s32 %v1147, 168
        %v1169 = vadd.s32 %v1147, 176
        %v1170 = vadd.s32 %v1147, 184
        %vm1171 = vcmp.lt.s32.totalorder %v1147, 0
        %v1172 = vsub.s32 0, %v1147
        %v1173 = vsel %vm1171, %v1172, %v1147
        %v1174 = vshrl.u32 %v1173, 4
        %v1175 = vand.u32 %v1173, 15
        %v1176 = vsub.s32 0, %v1175
        %v1177 = vsel %vm1171, %v1176, %v1175
        %vm1178 = vcmp.lt.s32.totalorder %v1148, 0
        %v1179 = vsub.s32 0, %v1148
        %v1180 = vsel %vm1178, %v1179, %v1148
        %v1181 = vshrl.u32 %v1180, 4
        %v1182 = vand.u32 %v1180, 15
        %v1183 = vsub.s32 0, %v1182
        %v1184 = vsel %vm1178, %v1183, %v1182
        %vm1185 = vcmp.lt.s32.totalorder %v1149, 0
        %v1186 = vsub.s32 0, %v1149
        %v1187 = vsel %vm1185, %v1186, %v1149
        %v1188 = vshrl.u32 %v1187, 4
        %v1189 = vand.u32 %v1187, 15
        %v1190 = vsub.s32 0, %v1189
        %v1191 = vsel %vm1185, %v1190, %v1189
        %vm1192 = vcmp.lt.s32.totalorder %v1150, 0
        %v1193 = vsub.s32 0, %v1150
        %v1194 = vsel %vm1192, %v1193, %v1150
        %v1195 = vshrl.u32 %v1194, 4
        %v1196 = vand.u32 %v1194, 15
        %v1197 = vsub.s32 0, %v1196
        %v1198 = vsel %vm1192, %v1197, %v1196
        %vm1199 = vcmp.lt.s32.totalorder %v1151, 0
        %v1200 = vsub.s32 0, %v1151
        %v1201 = vsel %vm1199, %v1200, %v1151
        %v1202 = vshrl.u32 %v1201, 4
        %v1203 = vand.u32 %v1201, 15
        %v1204 = vsub.s32 0, %v1203
        %v1205 = vsel %vm1199, %v1204, %v1203
        %vm1206 = vcmp.lt.s32.totalorder %v1152, 0
        %v1207 = vsub.s32 0, %v1152
        %v1208 = vsel %vm1206, %v1207, %v1152
        %v1209 = vshrl.u32 %v1208, 4
        %v1210 = vand.u32 %v1208, 15
        %v1211 = vsub.s32 0, %v1210
        %v1212 = vsel %vm1206, %v1211, %v1210
        %vm1213 = vcmp.lt.s32.totalorder %v1153, 0
        %v1214 = vsub.s32 0, %v1153
        %v1215 = vsel %vm1213, %v1214, %v1153
        %v1216 = vshrl.u32 %v1215, 4
        %v1217 = vand.u32 %v1215, 15
        %v1218 = vsub.s32 0, %v1217
        %v1219 = vsel %vm1213, %v1218, %v1217
        %vm1220 = vcmp.lt.s32.totalorder %v1154, 0
        %v1221 = vsub.s32 0, %v1154
        %v1222 = vsel %vm1220, %v1221, %v1154
        %v1223 = vshrl.u32 %v1222, 4
        %v1224 = vand.u32 %v1222, 15
        %v1225 = vsub.s32 0, %v1224
        %v1226 = vsel %vm1220, %v1225, %v1224
        %vm1227 = vcmp.lt.s32.totalorder %v1155, 0
        %v1228 = vsub.s32 0, %v1155
        %v1229 = vsel %vm1227, %v1228, %v1155
        %v1230 = vshrl.u32 %v1229, 4
        %v1231 = vand.u32 %v1229, 15
        %v1232 = vsub.s32 0, %v1231
        %v1233 = vsel %vm1227, %v1232, %v1231
        %vm1234 = vcmp.lt.s32.totalorder %v1156, 0
        %v1235 = vsub.s32 0, %v1156
        %v1236 = vsel %vm1234, %v1235, %v1156
        %v1237 = vshrl.u32 %v1236, 4
        %v1238 = vand.u32 %v1236, 15
        %v1239 = vsub.s32 0, %v1238
        %v1240 = vsel %vm1234, %v1239, %v1238
        %vm1241 = vcmp.lt.s32.totalorder %v1157, 0
        %v1242 = vsub.s32 0, %v1157
        %v1243 = vsel %vm1241, %v1242, %v1157
        %v1244 = vshrl.u32 %v1243, 4
        %v1245 = vand.u32 %v1243, 15
        %v1246 = vsub.s32 0, %v1245
        %v1247 = vsel %vm1241, %v1246, %v1245
        %vm1248 = vcmp.lt.s32.totalorder %v1158, 0
        %v1249 = vsub.s32 0, %v1158
        %v1250 = vsel %vm1248, %v1249, %v1158
        %v1251 = vshrl.u32 %v1250, 4
        %v1252 = vand.u32 %v1250, 15
        %v1253 = vsub.s32 0, %v1252
        %v1254 = vsel %vm1248, %v1253, %v1252
        %vm1255 = vcmp.lt.s32.totalorder %v1159, 0
        %v1256 = vsub.s32 0, %v1159
        %v1257 = vsel %vm1255, %v1256, %v1159
        %v1258 = vshrl.u32 %v1257, 4
        %v1259 = vand.u32 %v1257, 15
        %v1260 = vsub.s32 0, %v1259
        %v1261 = vsel %vm1255, %v1260, %v1259
        %vm1262 = vcmp.lt.s32.totalorder %v1160, 0
        %v1263 = vsub.s32 0, %v1160
        %v1264 = vsel %vm1262, %v1263, %v1160
        %v1265 = vshrl.u32 %v1264, 4
        %v1266 = vand.u32 %v1264, 15
        %v1267 = vsub.s32 0, %v1266
        %v1268 = vsel %vm1262, %v1267, %v1266
        %vm1269 = vcmp.lt.s32.totalorder %v1161, 0
        %v1270 = vsub.s32 0, %v1161
        %v1271 = vsel %vm1269, %v1270, %v1161
        %v1272 = vshrl.u32 %v1271, 4
        %v1273 = vand.u32 %v1271, 15
        %v1274 = vsub.s32 0, %v1273
        %v1275 = vsel %vm1269, %v1274, %v1273
        %vm1276 = vcmp.lt.s32.totalorder %v1162, 0
        %v1277 = vsub.s32 0, %v1162
        %v1278 = vsel %vm1276, %v1277, %v1162
        %v1279 = vshrl.u32 %v1278, 4
        %v1280 = vand.u32 %v1278, 15
        %v1281 = vsub.s32 0, %v1280
        %v1282 = vsel %vm1276, %v1281, %v1280
        %vm1283 = vcmp.lt.s32.totalorder %v1163, 0
        %v1284 = vsub.s32 0, %v1163
        %v1285 = vsel %vm1283, %v1284, %v1163
        %v1286 = vshrl.u32 %v1285, 4
        %v1287 = vand.u32 %v1285, 15
        %v1288 = vsub.s32 0, %v1287
        %v1289 = vsel %vm1283, %v1288, %v1287
        %vm1290 = vcmp.lt.s32.totalorder %v1164, 0
        %v1291 = vsub.s32 0, %v1164
        %v1292 = vsel %vm1290, %v1291, %v1164
        %v1293 = vshrl.u32 %v1292, 4
        %v1294 = vand.u32 %v1292, 15
        %v1295 = vsub.s32 0, %v1294
        %v1296 = vsel %vm1290, %v1295, %v1294
        %vm1297 = vcmp.lt.s32.totalorder %v1165, 0
        %v1298 = vsub.s32 0, %v1165
        %v1299 = vsel %vm1297, %v1298, %v1165
        %v1300 = vshrl.u32 %v1299, 4
        %v1301 = vand.u32 %v1299, 15
        %v1302 = vsub.s32 0, %v1301
        %v1303 = vsel %vm1297, %v1302, %v1301
        %vm1304 = vcmp.lt.s32.totalorder %v1166, 0
        %v1305 = vsub.s32 0, %v1166
        %v1306 = vsel %vm1304, %v1305, %v1166
        %v1307 = vshrl.u32 %v1306, 4
        %v1308 = vand.u32 %v1306, 15
        %v1309 = vsub.s32 0, %v1308
        %v1310 = vsel %vm1304, %v1309, %v1308
        %vm1311 = vcmp.lt.s32.totalorder %v1167, 0
        %v1312 = vsub.s32 0, %v1167
        %v1313 = vsel %vm1311, %v1312, %v1167
        %v1314 = vshrl.u32 %v1313, 4
        %v1315 = vand.u32 %v1313, 15
        %v1316 = vsub.s32 0, %v1315
        %v1317 = vsel %vm1311, %v1316, %v1315
        %vm1318 = vcmp.lt.s32.totalorder %v1168, 0
        %v1319 = vsub.s32 0, %v1168
        %v1320 = vsel %vm1318, %v1319, %v1168
        %v1321 = vshrl.u32 %v1320, 4
        %v1322 = vand.u32 %v1320, 15
        %v1323 = vsub.s32 0, %v1322
        %v1324 = vsel %vm1318, %v1323, %v1322
        %vm1325 = vcmp.lt.s32.totalorder %v1169, 0
        %v1326 = vsub.s32 0, %v1169
        %v1327 = vsel %vm1325, %v1326, %v1169
        %v1328 = vshrl.u32 %v1327, 4
        %v1329 = vand.u32 %v1327, 15
        %v1330 = vsub.s32 0, %v1329
        %v1331 = vsel %vm1325, %v1330, %v1329
        %vm1332 = vcmp.lt.s32.totalorder %v1170, 0
        %v1333 = vsub.s32 0, %v1170
        %v1334 = vsel %vm1332, %v1333, %v1170
        %v1335 = vshrl.u32 %v1334, 4
        %v1336 = vand.u32 %v1334, 15
        %v1337 = vsub.s32 0, %v1336
        %v1338 = vsel %vm1332, %v1337, %v1336
        %vm1339 = vcmp.ne.s32.totalorder %v1177, 0
        %vm1340 = vcmp.ne.s32.totalorder %v1184, 0
        %vm1341 = vcmp.ne.s32.totalorder %v1191, 0
        %vm1342 = vcmp.ne.s32.totalorder %v1198, 0
        %vm1343 = vcmp.ne.s32.totalorder %v1205, 0
        %vm1344 = vcmp.ne.s32.totalorder %v1212, 0
        %vm1345 = vcmp.ne.s32.totalorder %v1219, 0
        %vm1346 = vcmp.ne.s32.totalorder %v1226, 0
        %vm1347 = vcmp.ne.s32.totalorder %v1233, 0
        %vm1348 = vcmp.ne.s32.totalorder %v1240, 0
        %vm1349 = vcmp.ne.s32.totalorder %v1247, 0
        %vm1350 = vcmp.ne.s32.totalorder %v1254, 0
        %vm1351 = vcmp.ne.s32.totalorder %v1261, 0
        %vm1352 = vcmp.ne.s32.totalorder %v1268, 0
        %vm1353 = vcmp.ne.s32.totalorder %v1275, 0
        %vm1354 = vcmp.ne.s32.totalorder %v1282, 0
        %vm1355 = vcmp.ne.s32.totalorder %v1289, 0
        %vm1356 = vcmp.ne.s32.totalorder %v1296, 0
        %vm1357 = vcmp.ne.s32.totalorder %v1303, 0
        %vm1358 = vcmp.ne.s32.totalorder %v1310, 0
        %vm1359 = vcmp.ne.s32.totalorder %v1317, 0
        %vm1360 = vcmp.ne.s32.totalorder %v1324, 0
        %vm1361 = vcmp.ne.s32.totalorder %v1331, 0
        %vm1362 = vcmp.ne.s32.totalorder %v1338, 0
        %vm1363 = vcmp.lt.s32.totalorder %v1177, 0
        %vm1364 = vcmp.lt.s32.totalorder %v1184, 0
        %vm1365 = vcmp.lt.s32.totalorder %v1191, 0
        %vm1366 = vcmp.lt.s32.totalorder %v1198, 0
        %vm1367 = vcmp.lt.s32.totalorder %v1205, 0
        %vm1368 = vcmp.lt.s32.totalorder %v1212, 0
        %vm1369 = vcmp.lt.s32.totalorder %v1219, 0
        %vm1370 = vcmp.lt.s32.totalorder %v1226, 0
        %vm1371 = vcmp.lt.s32.totalorder %v1233, 0
        %vm1372 = vcmp.lt.s32.totalorder %v1240, 0
        %vm1373 = vcmp.lt.s32.totalorder %v1247, 0
        %vm1374 = vcmp.lt.s32.totalorder %v1254, 0
        %vm1375 = vcmp.lt.s32.totalorder %v1261, 0
        %vm1376 = vcmp.lt.s32.totalorder %v1268, 0
        %vm1377 = vcmp.lt.s32.totalorder %v1275, 0
        %vm1378 = vcmp.lt.s32.totalorder %v1282, 0
        %vm1379 = vcmp.lt.s32.totalorder %v1289, 0
        %vm1380 = vcmp.lt.s32.totalorder %v1296, 0
        %vm1381 = vcmp.lt.s32.totalorder %v1303, 0
        %vm1382 = vcmp.lt.s32.totalorder %v1310, 0
        %vm1383 = vcmp.lt.s32.totalorder %v1317, 0
        %vm1384 = vcmp.lt.s32.totalorder %v1324, 0
        %vm1385 = vcmp.lt.s32.totalorder %v1331, 0
        %vm1386 = vcmp.lt.s32.totalorder %v1338, 0
        %vm1387 = vmand %vm1363, %vm1339
        %vm1388 = vmand %vm1364, %vm1340
        %vm1389 = vmand %vm1365, %vm1341
        %vm1390 = vmand %vm1366, %vm1342
        %vm1391 = vmand %vm1367, %vm1343
        %vm1392 = vmand %vm1368, %vm1344
        %vm1393 = vmand %vm1369, %vm1345
        %vm1394 = vmand %vm1370, %vm1346
        %vm1395 = vmand %vm1371, %vm1347
        %vm1396 = vmand %vm1372, %vm1348
        %vm1397 = vmand %vm1373, %vm1349
        %vm1398 = vmand %vm1374, %vm1350
        %vm1399 = vmand %vm1375, %vm1351
        %vm1400 = vmand %vm1376, %vm1352
        %vm1401 = vmand %vm1377, %vm1353
        %vm1402 = vmand %vm1378, %vm1354
        %vm1403 = vmand %vm1379, %vm1355
        %vm1404 = vmand %vm1380, %vm1356
        %vm1405 = vmand %vm1381, %vm1357
        %vm1406 = vmand %vm1382, %vm1358
        %vm1407 = vmand %vm1383, %vm1359
        %vm1408 = vmand %vm1384, %vm1360
        %vm1409 = vmand %vm1385, %vm1361
        %vm1410 = vmand %vm1386, %vm1362
        %v1411 = vadd.s32 %v1177, 16
        %v1412 = vadd.s32 %v1184, 16
        %v1413 = vadd.s32 %v1191, 16
        %v1414 = vadd.s32 %v1198, 16
        %v1415 = vadd.s32 %v1205, 16
        %v1416 = vadd.s32 %v1212, 16
        %v1417 = vadd.s32 %v1219, 16
        %v1418 = vadd.s32 %v1226, 16
        %v1419 = vadd.s32 %v1233, 16
        %v1420 = vadd.s32 %v1240, 16
        %v1421 = vadd.s32 %v1247, 16
        %v1422 = vadd.s32 %v1254, 16
        %v1423 = vadd.s32 %v1261, 16
        %v1424 = vadd.s32 %v1268, 16
        %v1425 = vadd.s32 %v1275, 16
        %v1426 = vadd.s32 %v1282, 16
        %v1427 = vadd.s32 %v1289, 16
        %v1428 = vadd.s32 %v1296, 16
        %v1429 = vadd.s32 %v1303, 16
        %v1430 = vadd.s32 %v1310, 16
        %v1431 = vadd.s32 %v1317, 16
        %v1432 = vadd.s32 %v1324, 16
        %v1433 = vadd.s32 %v1331, 16
        %v1434 = vadd.s32 %v1338, 16
        %v1435 = vsel %vm1387, %v1411, %v1177
        %v1436 = vsel %vm1388, %v1412, %v1184
        %v1437 = vsel %vm1389, %v1413, %v1191
        %v1438 = vsel %vm1390, %v1414, %v1198
        %v1439 = vsel %vm1391, %v1415, %v1205
        %v1440 = vsel %vm1392, %v1416, %v1212
        %v1441 = vsel %vm1393, %v1417, %v1219
        %v1442 = vsel %vm1394, %v1418, %v1226
        %v1443 = vsel %vm1395, %v1419, %v1233
        %v1444 = vsel %vm1396, %v1420, %v1240
        %v1445 = vsel %vm1397, %v1421, %v1247
        %v1446 = vsel %vm1398, %v1422, %v1254
        %v1447 = vsel %vm1399, %v1423, %v1261
        %v1448 = vsel %vm1400, %v1424, %v1268
        %v1449 = vsel %vm1401, %v1425, %v1275
        %v1450 = vsel %vm1402, %v1426, %v1282
        %v1451 = vsel %vm1403, %v1427, %v1289
        %v1452 = vsel %vm1404, %v1428, %v1296
        %v1453 = vsel %vm1405, %v1429, %v1303
        %v1454 = vsel %vm1406, %v1430, %v1310
        %v1455 = vsel %vm1407, %v1431, %v1317
        %v1456 = vsel %vm1408, %v1432, %v1324
        %v1457 = vsel %vm1409, %v1433, %v1331
        %v1458 = vsel %vm1410, %v1434, %v1338
        %vm1459 = vcmp.lt.s32.totalorder %v1435, 12
        %vm1460 = vcmp.lt.s32.totalorder %v1436, 12
        %vm1461 = vcmp.lt.s32.totalorder %v1437, 12
        %vm1462 = vcmp.lt.s32.totalorder %v1438, 12
        %vm1463 = vcmp.lt.s32.totalorder %v1439, 12
        %vm1464 = vcmp.lt.s32.totalorder %v1440, 12
        %vm1465 = vcmp.lt.s32.totalorder %v1441, 12
        %vm1466 = vcmp.lt.s32.totalorder %v1442, 12
        %vm1467 = vcmp.lt.s32.totalorder %v1443, 12
        %vm1468 = vcmp.lt.s32.totalorder %v1444, 12
        %vm1469 = vcmp.lt.s32.totalorder %v1445, 12
        %vm1470 = vcmp.lt.s32.totalorder %v1446, 12
        %vm1471 = vcmp.lt.s32.totalorder %v1447, 12
        %vm1472 = vcmp.lt.s32.totalorder %v1448, 12
        %vm1473 = vcmp.lt.s32.totalorder %v1449, 12
        %vm1474 = vcmp.lt.s32.totalorder %v1450, 12
        %vm1475 = vcmp.lt.s32.totalorder %v1451, 12
        %vm1476 = vcmp.lt.s32.totalorder %v1452, 12
        %vm1477 = vcmp.lt.s32.totalorder %v1453, 12
        %vm1478 = vcmp.lt.s32.totalorder %v1454, 12
        %vm1479 = vcmp.lt.s32.totalorder %v1455, 12
        %vm1480 = vcmp.lt.s32.totalorder %v1456, 12
        %vm1481 = vcmp.lt.s32.totalorder %v1457, 12
        %vm1482 = vcmp.lt.s32.totalorder %v1458, 12
        %v1483 = vmax.f32 %v764, %v860
        %v1484 = vmax.f32 %v767, %v863
        %v1485 = vmax.f32 %v772, %v868
        %v1486 = vmax.f32 %v775, %v871
        %v1487 = vmax.f32 %v780, %v876
        %v1488 = vmax.f32 %v783, %v879
        %v1489 = vmax.f32 %v788, %v884
        %v1490 = vmax.f32 %v791, %v887
        %v1491 = vmax.f32 %v796, %v892
        %v1492 = vmax.f32 %v799, %v895
        %v1493 = vmax.f32 %v804, %v900
        %v1494 = vmax.f32 %v807, %v903
        %v1495 = vmax.f32 %v812, %v908
        %v1496 = vmax.f32 %v815, %v911
        %v1497 = vmax.f32 %v820, %v916
        %v1498 = vmax.f32 %v823, %v919
        %v1499 = vmax.f32 %v828, %v924
        %v1500 = vmax.f32 %v831, %v927
        %v1501 = vmax.f32 %v836, %v932
        %v1502 = vmax.f32 %v839, %v935
        %v1503 = vmax.f32 %v844, %v940
        %v1504 = vmax.f32 %v847, %v943
        %v1505 = vmax.f32 %v852, %v948
        %v1506 = vmax.f32 %v855, %v951
        %v1507 = vmax.f32 %v956, %v1052
        %v1508 = vmax.f32 %v959, %v1055
        %v1509 = vmax.f32 %v964, %v1060
        %v1510 = vmax.f32 %v967, %v1063
        %v1511 = vmax.f32 %v972, %v1068
        %v1512 = vmax.f32 %v975, %v1071
        %v1513 = vmax.f32 %v980, %v1076
        %v1514 = vmax.f32 %v983, %v1079
        %v1515 = vmax.f32 %v988, %v1084
        %v1516 = vmax.f32 %v991, %v1087
        %v1517 = vmax.f32 %v996, %v1092
        %v1518 = vmax.f32 %v999, %v1095
        %v1519 = vmax.f32 %v1004, %v1100
        %v1520 = vmax.f32 %v1007, %v1103
        %v1521 = vmax.f32 %v1012, %v1108
        %v1522 = vmax.f32 %v1015, %v1111
        %v1523 = vmax.f32 %v1020, %v1116
        %v1524 = vmax.f32 %v1023, %v1119
        %v1525 = vmax.f32 %v1028, %v1124
        %v1526 = vmax.f32 %v1031, %v1127
        %v1527 = vmax.f32 %v1036, %v1132
        %v1528 = vmax.f32 %v1039, %v1135
        %v1529 = vmax.f32 %v1044, %v1140
        %v1530 = vmax.f32 %v1047, %v1143
        %v1531 = vmax.f32 %v1483, %v1507
        %v1532 = vmax.f32 %v1484, %v1508
        %v1533 = vmax.f32 %v1485, %v1509
        %v1534 = vmax.f32 %v1486, %v1510
        %v1535 = vmax.f32 %v1487, %v1511
        %v1536 = vmax.f32 %v1488, %v1512
        %v1537 = vmax.f32 %v1489, %v1513
        %v1538 = vmax.f32 %v1490, %v1514
        %v1539 = vmax.f32 %v1491, %v1515
        %v1540 = vmax.f32 %v1492, %v1516
        %v1541 = vmax.f32 %v1493, %v1517
        %v1542 = vmax.f32 %v1494, %v1518
        %v1543 = vmax.f32 %v1495, %v1519
        %v1544 = vmax.f32 %v1496, %v1520
        %v1545 = vmax.f32 %v1497, %v1521
        %v1546 = vmax.f32 %v1498, %v1522
        %v1547 = vmax.f32 %v1499, %v1523
        %v1548 = vmax.f32 %v1500, %v1524
        %v1549 = vmax.f32 %v1501, %v1525
        %v1550 = vmax.f32 %v1502, %v1526
        %v1551 = vmax.f32 %v1503, %v1527
        %v1552 = vmax.f32 %v1504, %v1528
        %v1553 = vmax.f32 %v1505, %v1529
        %v1554 = vmax.f32 %v1506, %v1530
        %v1555 = vld [vmem:[%s2] sm:$0x1]
        %v1557 = vlaneseq
        %v1558 = vshrl.u32 %v1557, 7
        %v1559 = vsub.s32 0, %v1558
        %v1560 = vrot.slane %v1555, %v1559
        %v1562 = vadd.f32 %v1531, %v1560
        %v1563 = vadd.f32 %v1532, %v1560
        %v1564 = vadd.f32 %v1533, %v1560
        %v1565 = vadd.f32 %v1534, %v1560
        %v1566 = vadd.f32 %v1535, %v1560
        %v1567 = vadd.f32 %v1536, %v1560
        %v1568 = vadd.f32 %v1537, %v1560
        %v1569 = vadd.f32 %v1538, %v1560
        %v1570 = vadd.f32 %v1539, %v1560
        %v1571 = vadd.f32 %v1540, %v1560
        %v1572 = vadd.f32 %v1541, %v1560
        %v1573 = vadd.f32 %v1542, %v1560
        %v1574 = vadd.f32 %v1543, %v1560
        %v1575 = vadd.f32 %v1544, %v1560
        %v1576 = vadd.f32 %v1545, %v1560
        %v1577 = vadd.f32 %v1546, %v1560
        %v1578 = vadd.f32 %v1547, %v1560
        %v1579 = vadd.f32 %v1548, %v1560
        %v1580 = vadd.f32 %v1549, %v1560
        %v1581 = vadd.f32 %v1550, %v1560
        %v1582 = vadd.f32 %v1551, %v1560
        %v1583 = vadd.f32 %v1552, %v1560
        %v1584 = vadd.f32 %v1553, %v1560
        %v1585 = vadd.f32 %v1554, %v1560
        %v1586 = vmax.f32 %v1562, 0.0
        %v1587 = vmax.f32 %v1563, 0.0
        %v1588 = vmax.f32 %v1564, 0.0
        %v1589 = vmax.f32 %v1565, 0.0
        %v1590 = vmax.f32 %v1566, 0.0
        %v1591 = vmax.f32 %v1567, 0.0
        %v1592 = vmax.f32 %v1568, 0.0
        %v1593 = vmax.f32 %v1569, 0.0
        %v1594 = vmax.f32 %v1570, 0.0
        %v1595 = vmax.f32 %v1571, 0.0
        %v1596 = vmax.f32 %v1572, 0.0
        %v1597 = vmax.f32 %v1573, 0.0
        %v1598 = vmax.f32 %v1574, 0.0
        %v1599 = vmax.f32 %v1575, 0.0
        %v1600 = vmax.f32 %v1576, 0.0
        %v1601 = vmax.f32 %v1577, 0.0
        %v1602 = vmax.f32 %v1578, 0.0
        %v1603 = vmax.f32 %v1579, 0.0
        %v1604 = vmax.f32 %v1580, 0.0
        %v1605 = vmax.f32 %v1581, 0.0
        %v1606 = vmax.f32 %v1582, 0.0
        %v1607 = vmax.f32 %v1583, 0.0
        %v1608 = vmax.f32 %v1584, 0.0
        %v1609 = vmax.f32 %v1585, 0.0
        %v1610 = vsel %vm1459, %v1586, 0.0
        %v1611 = vsel %vm1460, %v1587, 0.0
        %v1612 = vsel %vm1461, %v1588, 0.0
        %v1613 = vsel %vm1462, %v1589, 0.0
        %v1614 = vsel %vm1463, %v1590, 0.0
        %v1615 = vsel %vm1464, %v1591, 0.0
        %v1616 = vsel %vm1465, %v1592, 0.0
        %v1617 = vsel %vm1466, %v1593, 0.0
        %v1618 = vsel %vm1467, %v1594, 0.0
        %v1619 = vsel %vm1468, %v1595, 0.0
        %v1620 = vsel %vm1469, %v1596, 0.0
        %v1621 = vsel %vm1470, %v1597, 0.0
        %v1622 = vsel %vm1471, %v1598, 0.0
        %v1623 = vsel %vm1472, %v1599, 0.0
        %v1624 = vsel %vm1473, %v1600, 0.0
        %v1625 = vsel %vm1474, %v1601, 0.0
        %v1626 = vsel %vm1475, %v1602, 0.0
        %v1627 = vsel %vm1476, %v1603, 0.0
        %v1628 = vsel %vm1477, %v1604, 0.0
        %v1629 = vsel %vm1478, %v1605, 0.0
        %v1630 = vsel %vm1479, %v1606, 0.0
        %v1631 = vsel %vm1480, %v1607, 0.0
        %v1632 = vsel %vm1481, %v1608, 0.0
        %v1633 = vsel %vm1482, %v1609, 0.0
        %v1634 = vpack.c.bf16 %v1611, %v1610
        %v1635 = vpack.c.bf16 %v1613, %v1612
        %v1636 = vpack.c.bf16 %v1615, %v1614
        %v1637 = vpack.c.bf16 %v1617, %v1616
        %v1638 = vpack.c.bf16 %v1619, %v1618
        %v1639 = vpack.c.bf16 %v1621, %v1620
        %v1640 = vpack.c.bf16 %v1623, %v1622
        %v1641 = vpack.c.bf16 %v1625, %v1624
        %v1642 = vpack.c.bf16 %v1627, %v1626
        %v1643 = vpack.c.bf16 %v1629, %v1628
        %v1644 = vpack.c.bf16 %v1631, %v1630
        %v1645 = vpack.c.bf16 %v1633, %v1632
        %vm1646 = vcmask 130048
        %1647 = vst.msk [vmem:[#allocation2] sm:$0xff] %vm1646, 0
        %vm1648 = vcmask 122880
        %vm1649 = vsmask.f32 256
        %vm1650 = vmand %vm1648, %vm1649
        %v1651 = vld [vmem:[#allocation2 + $0x8] sm:$0x1]
        %v1652 = vsel %vm1650, 0, %v1651
        %1653 = vst [vmem:[#allocation2 + $0x8] sm:$0x1] %v1652
        %vm1654 = vcmask 130048
        %vm1655 = vsmask.f32 7938
        %vm1656 = vmand %vm1654, %vm1655
        %v1657 = vld [vmem:[#allocation2 + $0x68] sm:$0xff]
        %v1658 = vsel %vm1656, 0, %v1657
        %1659 = vst [vmem:[#allocation2 + $0x68] sm:$0xff] %v1658
        %vm1660 = vcmask 122880
        %1661 = vst.msk [vmem:[#allocation2 + $0x70] sm:$0x1] %vm1660, 0
        %v1663 = vshrl.u32 %v1634, 16
        %v1665 = vrot.slane %v1663, 7
        %v1666 = vshll.u32 %v1634, 16
        %v1668 = vor.u32 %v1665, %v1666
        %v1670 = vshrl.u32 %v1635, 16
        %v1672 = vrot.slane %v1670, 7
        %v1673 = vshll.u32 %v1635, 16
        %v1675 = vor.u32 %v1672, %v1673
        %v1676 = vsel %vm1649, %v1665, %v1675
        %v1678 = vshrl.u32 %v1636, 16
        %v1680 = vrot.slane %v1678, 7
        %v1681 = vshll.u32 %v1636, 16
        %v1683 = vor.u32 %v1680, %v1681
        %v1684 = vsel %vm1649, %v1672, %v1683
        %v1686 = vshrl.u32 %v1637, 16
        %v1688 = vrot.slane %v1686, 7
        %v1689 = vshll.u32 %v1637, 16
        %v1691 = vor.u32 %v1688, %v1689
        %v1692 = vsel %vm1649, %v1680, %v1691
        %v1694 = vshrl.u32 %v1638, 16
        %v1696 = vrot.slane %v1694, 7
        %v1697 = vshll.u32 %v1638, 16
        %v1699 = vor.u32 %v1696, %v1697
        %v1700 = vsel %vm1649, %v1688, %v1699
        %v1702 = vshrl.u32 %v1639, 16
        %v1704 = vrot.slane %v1702, 7
        %v1705 = vshll.u32 %v1639, 16
        %v1707 = vor.u32 %v1704, %v1705
        %v1708 = vsel %vm1649, %v1696, %v1707
        %v1710 = vshrl.u32 %v1640, 16
        %v1712 = vrot.slane %v1710, 7
        %v1713 = vshll.u32 %v1640, 16
        %v1715 = vor.u32 %v1712, %v1713
        %v1716 = vsel %vm1649, %v1704, %v1715
        %v1718 = vshrl.u32 %v1641, 16
        %v1720 = vrot.slane %v1718, 7
        %v1721 = vshll.u32 %v1641, 16
        %v1723 = vor.u32 %v1720, %v1721
        %v1724 = vsel %vm1649, %v1712, %v1723
        %v1726 = vshrl.u32 %v1642, 16
        %v1728 = vrot.slane %v1726, 7
        %v1729 = vshll.u32 %v1642, 16
        %v1731 = vor.u32 %v1728, %v1729
        %v1732 = vsel %vm1649, %v1720, %v1731
        %v1734 = vshrl.u32 %v1643, 16
        %v1736 = vrot.slane %v1734, 7
        %v1737 = vshll.u32 %v1643, 16
        %v1739 = vor.u32 %v1736, %v1737
        %v1740 = vsel %vm1649, %v1728, %v1739
        %v1742 = vshrl.u32 %v1644, 16
        %v1744 = vrot.slane %v1742, 7
        %v1745 = vshll.u32 %v1644, 16
        %v1747 = vor.u32 %v1744, %v1745
        %v1748 = vsel %vm1649, %v1736, %v1747
        %v1750 = vshrl.u32 %v1645, 16
        %v1752 = vrot.slane %v1750, 7
        %v1753 = vshll.u32 %v1645, 16
        %v1755 = vor.u32 %v1752, %v1753
        %v1756 = vsel %vm1649, %v1744, %v1755
        %v1770 = vld [vmem:[#allocation2 + $0x8] sm:$0xff]
        %v1771 = vsel %vm1656, %v1668, %v1770
        %1772 = vst [vmem:[#allocation2 + $0x8] sm:$0xff] %v1771
        %1773 = vst.msk [vmem:[#allocation2 + $0x10] sm:$0xff] %vm1646, %v1676
        %1774 = vst.msk [vmem:[#allocation2 + $0x18] sm:$0xff] %vm1646, %v1684
        %1775 = vst.msk [vmem:[#allocation2 + $0x20] sm:$0xff] %vm1646, %v1692
        %1776 = vst.msk [vmem:[#allocation2 + $0x28] sm:$0xff] %vm1646, %v1700
        %1777 = vst.msk [vmem:[#allocation2 + $0x30] sm:$0xff] %vm1646, %v1708
        %1778 = vst.msk [vmem:[#allocation2 + $0x38] sm:$0xff] %vm1646, %v1716
        %1779 = vst.msk [vmem:[#allocation2 + $0x40] sm:$0xff] %vm1646, %v1724
        %1780 = vst.msk [vmem:[#allocation2 + $0x48] sm:$0xff] %vm1646, %v1732
        %1781 = vst.msk [vmem:[#allocation2 + $0x50] sm:$0xff] %vm1646, %v1740
        %1782 = vst.msk [vmem:[#allocation2 + $0x58] sm:$0xff] %vm1646, %v1748
        %1783 = vst.msk [vmem:[#allocation2 + $0x60] sm:$0xff] %vm1646, %v1756
        %v1784 = vld [vmem:[#allocation2 + $0x68] sm:$0x1]
        %v1785 = vsel %vm1650, %v1752, %v1784
        %1786 = vst [vmem:[#allocation2 + $0x68] sm:$0x1] %v1785
        %v1787 = vld [vmem:[#allocation2] sm:$0xff]
        %v1788 = vld [vmem:[#allocation2 + $0x8] sm:$0xff]
        %v1789 = vld [vmem:[#allocation2 + $0x10] sm:$0xff]
        %v1790 = vld [vmem:[#allocation2 + $0x18] sm:$0xff]
        %v1791 = vld [vmem:[#allocation2 + $0x20] sm:$0xff]
        %v1792 = vld [vmem:[#allocation2 + $0x28] sm:$0xff]
        %v1793 = vld [vmem:[#allocation2 + $0x30] sm:$0xff]
        %v1794 = vld [vmem:[#allocation2 + $0x38] sm:$0xff]
        %v1795 = vld [vmem:[#allocation2 + $0x40] sm:$0xff]
        %v1796 = vld [vmem:[#allocation2 + $0x48] sm:$0xff]
        %v1797 = vld [vmem:[#allocation2 + $0x50] sm:$0xff]
        %v1798 = vld [vmem:[#allocation2 + $0x58] sm:$0xff]
        %v1799 = vld [vmem:[#allocation2 + $0x60] sm:$0x1]
        %v1800 = vld [vmem:[#allocation2] sm:$0xfe]
        %v1801 = vld [vmem:[#allocation2 + $0x60] sm:$0xff]
        %v1802 = vld [vmem:[#allocation2 + $0x68] sm:$0x1]
        %v1803 = vld [vmem:[#allocation2 + $0x8] sm:$0xfe]
        %v1804 = vld [vmem:[#allocation2 + $0x68] sm:$0xff]
        %v1805 = vld [vmem:[#allocation2 + $0x70] sm:$0x1]
        %v1806 = vld [vmem:[#allocation2 + $0x10] sm:$0xfe]
        %vm1807 = vsmask.f32 7424
        %v1809 = vshrl.u32 %v1787, 16
        %v1811 = vshll.u32 %v1787, 16
        %v1813 = vrot.slane %v1811, 1
        %v1814 = vor.u32 %v1809, %v1813
        %v1816 = vshll.u32 %v1788, 16
        %v1818 = vrot.slane %v1816, 1
        %v1819 = vsel %vm1807, %v1814, %v1818
        %v1820 = vshrl.u32 %v1788, 16
        %v1822 = vor.u32 %v1820, %v1818
        %v1824 = vshll.u32 %v1789, 16
        %v1826 = vrot.slane %v1824, 1
        %v1827 = vsel %vm1807, %v1822, %v1826
        %v1828 = vshrl.u32 %v1789, 16
        %v1830 = vor.u32 %v1828, %v1826
        %v1832 = vshll.u32 %v1790, 16
        %v1834 = vrot.slane %v1832, 1
        %v1835 = vsel %vm1807, %v1830, %v1834
        %v1836 = vshrl.u32 %v1790, 16
        %v1838 = vor.u32 %v1836, %v1834
        %v1840 = vshll.u32 %v1791, 16
        %v1842 = vrot.slane %v1840, 1
        %v1843 = vsel %vm1807, %v1838, %v1842
        %v1844 = vshrl.u32 %v1791, 16
        %v1846 = vor.u32 %v1844, %v1842
        %v1848 = vshll.u32 %v1792, 16
        %v1850 = vrot.slane %v1848, 1
        %v1851 = vsel %vm1807, %v1846, %v1850
        %v1852 = vshrl.u32 %v1792, 16
        %v1854 = vor.u32 %v1852, %v1850
        %v1856 = vshll.u32 %v1793, 16
        %v1858 = vrot.slane %v1856, 1
        %v1859 = vsel %vm1807, %v1854, %v1858
        %v1860 = vshrl.u32 %v1793, 16
        %v1862 = vor.u32 %v1860, %v1858
        %v1864 = vshll.u32 %v1794, 16
        %v1866 = vrot.slane %v1864, 1
        %v1867 = vsel %vm1807, %v1862, %v1866
        %v1868 = vshrl.u32 %v1794, 16
        %v1870 = vor.u32 %v1868, %v1866
        %v1872 = vshll.u32 %v1795, 16
        %v1874 = vrot.slane %v1872, 1
        %v1875 = vsel %vm1807, %v1870, %v1874
        %v1876 = vshrl.u32 %v1795, 16
        %v1878 = vor.u32 %v1876, %v1874
        %v1880 = vshll.u32 %v1796, 16
        %v1882 = vrot.slane %v1880, 1
        %v1883 = vsel %vm1807, %v1878, %v1882
        %v1884 = vshrl.u32 %v1796, 16
        %v1886 = vor.u32 %v1884, %v1882
        %v1888 = vshll.u32 %v1797, 16
        %v1890 = vrot.slane %v1888, 1
        %v1891 = vsel %vm1807, %v1886, %v1890
        %v1892 = vshrl.u32 %v1797, 16
        %v1894 = vor.u32 %v1892, %v1890
        %v1896 = vshll.u32 %v1798, 16
        %v1898 = vrot.slane %v1896, 1
        %v1899 = vsel %vm1807, %v1894, %v1898
        %v1900 = vshrl.u32 %v1798, 16
        %v1902 = vor.u32 %v1900, %v1898
        %v1904 = vshll.u32 %v1799, 16
        %v1906 = vrot.slane %v1904, 1
        %v1907 = vsel %vm1807, %v1902, %v1906
        %1908 = vrot.lane.b32.xlu0 %v1819, 16
        %v1909 = vpop.permute.xlu0 %1908
        %1910 = vrot.lane.b32.xlu0 %v1827, 16
        %v1911 = vpop.permute.xlu0 %1910
        %1912 = vrot.lane.b32.xlu0 %v1835, 16
        %v1913 = vpop.permute.xlu0 %1912
        %1914 = vrot.lane.b32.xlu0 %v1843, 16
        %v1915 = vpop.permute.xlu0 %1914
        %1916 = vrot.lane.b32.xlu0 %v1851, 16
        %v1917 = vpop.permute.xlu0 %1916
        %1918 = vrot.lane.b32.xlu0 %v1859, 16
        %v1919 = vpop.permute.xlu0 %1918
        %1920 = vrot.lane.b32.xlu0 %v1867, 16
        %v1921 = vpop.permute.xlu0 %1920
        %1922 = vrot.lane.b32.xlu0 %v1875, 16
        %v1923 = vpop.permute.xlu0 %1922
        %1924 = vrot.lane.b32.xlu0 %v1883, 16
        %v1925 = vpop.permute.xlu0 %1924
        %1926 = vrot.lane.b32.xlu0 %v1891, 16
        %v1927 = vpop.permute.xlu0 %1926
        %1928 = vrot.lane.b32.xlu0 %v1899, 16
        %v1929 = vpop.permute.xlu0 %1928
        %1930 = vrot.lane.b32.xlu0 %v1907, 16
        %v1931 = vpop.permute.xlu0 %1930
        %vm1945 = vcmask 1046528
        %v1946 = vrot.slane %v1800, 1
        %v1947 = vrot.slane %v1788, 1
        %v1948 = vsel %vm1945, %v1946, %v1947
        %v1949 = vrot.slane %v1789, 1
        %v1950 = vsel %vm1945, %v1947, %v1949
        %v1951 = vrot.slane %v1790, 1
        %v1952 = vsel %vm1945, %v1949, %v1951
        %v1953 = vrot.slane %v1791, 1
        %v1954 = vsel %vm1945, %v1951, %v1953
        %v1955 = vrot.slane %v1792, 1
        %v1956 = vsel %vm1945, %v1953, %v1955
        %v1957 = vrot.slane %v1793, 1
        %v1958 = vsel %vm1945, %v1955, %v1957
        %v1959 = vrot.slane %v1794, 1
        %v1960 = vsel %vm1945, %v1957, %v1959
        %v1961 = vrot.slane %v1795, 1
        %v1962 = vsel %vm1945, %v1959, %v1961
        %v1963 = vrot.slane %v1796, 1
        %v1964 = vsel %vm1945, %v1961, %v1963
        %v1965 = vrot.slane %v1797, 1
        %v1966 = vsel %vm1945, %v1963, %v1965
        %v1967 = vrot.slane %v1798, 1
        %v1968 = vsel %vm1945, %v1965, %v1967
        %v1969 = vrot.slane %v1799, 1
        %v1970 = vsel %vm1945, %v1967, %v1969
        %1971 = vrot.lane.b32.xlu0 %v1948, 32
        %v1972 = vpop.permute.xlu0 %1971
        %1973 = vrot.lane.b32.xlu0 %v1950, 32
        %v1974 = vpop.permute.xlu0 %1973
        %1975 = vrot.lane.b32.xlu0 %v1952, 32
        %v1976 = vpop.permute.xlu0 %1975
        %1977 = vrot.lane.b32.xlu0 %v1954, 32
        %v1978 = vpop.permute.xlu0 %1977
        %1979 = vrot.lane.b32.xlu0 %v1956, 32
        %v1980 = vpop.permute.xlu0 %1979
        %1981 = vrot.lane.b32.xlu0 %v1958, 32
        %v1982 = vpop.permute.xlu0 %1981
        %1983 = vrot.lane.b32.xlu0 %v1960, 32
        %v1984 = vpop.permute.xlu0 %1983
        %1985 = vrot.lane.b32.xlu0 %v1962, 32
        %v1986 = vpop.permute.xlu0 %1985
        %1987 = vrot.lane.b32.xlu0 %v1964, 32
        %v1988 = vpop.permute.xlu0 %1987
        %1989 = vrot.lane.b32.xlu0 %v1966, 32
        %v1990 = vpop.permute.xlu0 %1989
        %1991 = vrot.lane.b32.xlu0 %v1968, 32
        %v1992 = vpop.permute.xlu0 %1991
        %1993 = vrot.lane.b32.xlu0 %v1970, 32
        %v1994 = vpop.permute.xlu0 %1993
        %1996 = vrot.lane.b32.xlu0 %v1788, 48
        %v1997 = vpop.permute.xlu0 %1996
        %1998 = vrot.lane.b32.xlu0 %v1789, 48
        %v1999 = vpop.permute.xlu0 %1998
        %2000 = vrot.lane.b32.xlu0 %v1790, 48
        %v2001 = vpop.permute.xlu0 %2000
        %2002 = vrot.lane.b32.xlu0 %v1791, 48
        %v2003 = vpop.permute.xlu0 %2002
        %2004 = vrot.lane.b32.xlu0 %v1792, 48
        %v2005 = vpop.permute.xlu0 %2004
        %2006 = vrot.lane.b32.xlu0 %v1793, 48
        %v2007 = vpop.permute.xlu0 %2006
        %2008 = vrot.lane.b32.xlu0 %v1794, 48
        %v2009 = vpop.permute.xlu0 %2008
        %2010 = vrot.lane.b32.xlu0 %v1795, 48
        %v2011 = vpop.permute.xlu0 %2010
        %2012 = vrot.lane.b32.xlu0 %v1796, 48
        %v2013 = vpop.permute.xlu0 %2012
        %2014 = vrot.lane.b32.xlu0 %v1797, 48
        %v2015 = vpop.permute.xlu0 %2014
        %2016 = vrot.lane.b32.xlu0 %v1798, 48
        %v2017 = vpop.permute.xlu0 %2016
        %2018 = vrot.lane.b32.xlu0 %v1801, 48
        %v2019 = vpop.permute.xlu0 %2018
        %v2021 = vshll.u32 %v1801, 16
        %v2023 = vrot.slane %v2021, 1
        %v2024 = vsel %vm1807, %v1902, %v2023
        %v2025 = vshrl.u32 %v1801, 16
        %v2027 = vor.u32 %v2025, %v2023
        %v2029 = vshll.u32 %v1802, 16
        %v2031 = vrot.slane %v2029, 1
        %v2032 = vsel %vm1807, %v2027, %v2031
        %2033 = vrot.lane.b32.xlu0 %v1827, 64
        %v2034 = vpop.permute.xlu0 %2033
        %2035 = vrot.lane.b32.xlu0 %v1835, 64
        %v2036 = vpop.permute.xlu0 %2035
        %2037 = vrot.lane.b32.xlu0 %v1843, 64
        %v2038 = vpop.permute.xlu0 %2037
        %2039 = vrot.lane.b32.xlu0 %v1851, 64
        %v2040 = vpop.permute.xlu0 %2039
        %2041 = vrot.lane.b32.xlu0 %v1859, 64
        %v2042 = vpop.permute.xlu0 %2041
        %2043 = vrot.lane.b32.xlu0 %v1867, 64
        %v2044 = vpop.permute.xlu0 %2043
        %2045 = vrot.lane.b32.xlu0 %v1875, 64
        %v2046 = vpop.permute.xlu0 %2045
        %2047 = vrot.lane.b32.xlu0 %v1883, 64
        %v2048 = vpop.permute.xlu0 %2047
        %2049 = vrot.lane.b32.xlu0 %v1891, 64
        %v2050 = vpop.permute.xlu0 %2049
        %2051 = vrot.lane.b32.xlu0 %v1899, 64
        %v2052 = vpop.permute.xlu0 %2051
        %2053 = vrot.lane.b32.xlu0 %v2024, 64
        %v2054 = vpop.permute.xlu0 %2053
        %2055 = vrot.lane.b32.xlu0 %v2032, 64
        %v2056 = vpop.permute.xlu0 %2055
        %v2059 = vrot.slane %v1803, 1
        %v2060 = vsel %vm1945, %v2059, %v1949
        %v2061 = vrot.slane %v1801, 1
        %v2062 = vsel %vm1945, %v1967, %v2061
        %v2063 = vrot.slane %v1802, 1
        %v2064 = vsel %vm1945, %v2061, %v2063
        %2065 = vrot.lane.b32.xlu0 %v2060, 80
        %v2066 = vpop.permute.xlu0 %2065
        %2067 = vrot.lane.b32.xlu0 %v1952, 80
        %v2068 = vpop.permute.xlu0 %2067
        %2069 = vrot.lane.b32.xlu0 %v1954, 80
        %v2070 = vpop.permute.xlu0 %2069
        %2071 = vrot.lane.b32.xlu0 %v1956, 80
        %v2072 = vpop.permute.xlu0 %2071
        %2073 = vrot.lane.b32.xlu0 %v1958, 80
        %v2074 = vpop.permute.xlu0 %2073
        %2075 = vrot.lane.b32.xlu0 %v1960, 80
        %v2076 = vpop.permute.xlu0 %2075
        %2077 = vrot.lane.b32.xlu0 %v1962, 80
        %v2078 = vpop.permute.xlu0 %2077
        %2079 = vrot.lane.b32.xlu0 %v1964, 80
        %v2080 = vpop.permute.xlu0 %2079
        %2081 = vrot.lane.b32.xlu0 %v1966, 80
        %v2082 = vpop.permute.xlu0 %2081
        %2083 = vrot.lane.b32.xlu0 %v1968, 80
        %v2084 = vpop.permute.xlu0 %2083
        %2085 = vrot.lane.b32.xlu0 %v2062, 80
        %v2086 = vpop.permute.xlu0 %2085
        %2087 = vrot.lane.b32.xlu0 %v2064, 80
        %v2088 = vpop.permute.xlu0 %2087
        %2090 = vrot.lane.b32.xlu0 %v1789, 96
        %v2091 = vpop.permute.xlu0 %2090
        %2092 = vrot.lane.b32.xlu0 %v1790, 96
        %v2093 = vpop.permute.xlu0 %2092
        %2094 = vrot.lane.b32.xlu0 %v1791, 96
        %v2095 = vpop.permute.xlu0 %2094
        %2096 = vrot.lane.b32.xlu0 %v1792, 96
        %v2097 = vpop.permute.xlu0 %2096
        %2098 = vrot.lane.b32.xlu0 %v1793, 96
        %v2099 = vpop.permute.xlu0 %2098
        %2100 = vrot.lane.b32.xlu0 %v1794, 96
        %v2101 = vpop.permute.xlu0 %2100
        %2102 = vrot.lane.b32.xlu0 %v1795, 96
        %v2103 = vpop.permute.xlu0 %2102
        %2104 = vrot.lane.b32.xlu0 %v1796, 96
        %v2105 = vpop.permute.xlu0 %2104
        %2106 = vrot.lane.b32.xlu0 %v1797, 96
        %v2107 = vpop.permute.xlu0 %2106
        %2108 = vrot.lane.b32.xlu0 %v1798, 96
        %v2109 = vpop.permute.xlu0 %2108
        %2110 = vrot.lane.b32.xlu0 %v1801, 96
        %v2111 = vpop.permute.xlu0 %2110
        %2112 = vrot.lane.b32.xlu0 %v1804, 96
        %v2113 = vpop.permute.xlu0 %2112
        %v2115 = vshll.u32 %v1804, 16
        %v2117 = vrot.slane %v2115, 1
        %v2118 = vsel %vm1807, %v2027, %v2117
        %v2119 = vshrl.u32 %v1804, 16
        %v2121 = vor.u32 %v2119, %v2117
        %v2123 = vshll.u32 %v1805, 16
        %v2125 = vrot.slane %v2123, 1
        %v2126 = vsel %vm1807, %v2121, %v2125
        %2127 = vrot.lane.b32.xlu0 %v1835, 112
        %v2128 = vpop.permute.xlu0 %2127
        %2129 = vrot.lane.b32.xlu0 %v1843, 112
        %v2130 = vpop.permute.xlu0 %2129
        %2131 = vrot.lane.b32.xlu0 %v1851, 112
        %v2132 = vpop.permute.xlu0 %2131
        %2133 = vrot.lane.b32.xlu0 %v1859, 112
        %v2134 = vpop.permute.xlu0 %2133
        %2135 = vrot.lane.b32.xlu0 %v1867, 112
        %v2136 = vpop.permute.xlu0 %2135
        %2137 = vrot.lane.b32.xlu0 %v1875, 112
        %v2138 = vpop.permute.xlu0 %2137
        %2139 = vrot.lane.b32.xlu0 %v1883, 112
        %v2140 = vpop.permute.xlu0 %2139
        %2141 = vrot.lane.b32.xlu0 %v1891, 112
        %v2142 = vpop.permute.xlu0 %2141
        %2143 = vrot.lane.b32.xlu0 %v1899, 112
        %v2144 = vpop.permute.xlu0 %2143
        %2145 = vrot.lane.b32.xlu0 %v2024, 112
        %v2146 = vpop.permute.xlu0 %2145
        %2147 = vrot.lane.b32.xlu0 %v2118, 112
        %v2148 = vpop.permute.xlu0 %2147
        %2149 = vrot.lane.b32.xlu0 %v2126, 112
        %v2150 = vpop.permute.xlu0 %2149
        %v2153 = vrot.slane %v1806, 1
        %v2154 = vsel %vm1945, %v2153, %v1951
        %v2155 = vrot.slane %v1804, 1
        %v2156 = vsel %vm1945, %v2061, %v2155
        %v2157 = vrot.slane %v1805, 1
        %v2158 = vsel %vm1945, %v2155, %v2157
        %v2160 = vsel %vm1646, %v1787, %v1909
        %v2162 = vsel %vm1646, %v1788, %v1911
        %v2164 = vsel %vm1646, %v1789, %v1913
        %v2166 = vsel %vm1646, %v1790, %v1915
        %v2168 = vsel %vm1646, %v1791, %v1917
        %v2170 = vsel %vm1646, %v1792, %v1919
        %v2172 = vsel %vm1646, %v1793, %v1921
        %v2174 = vsel %vm1646, %v1794, %v1923
        %v2176 = vsel %vm1646, %v1795, %v1925
        %v2178 = vsel %vm1646, %v1796, %v1927
        %v2180 = vsel %vm1646, %v1797, %v1929
        %v2182 = vsel %vm1646, %v1798, %v1931
        %vm2183 = vcmask 261120
        %v2185 = vsel %vm2183, %v2160, %v1972
        %v2187 = vsel %vm2183, %v2162, %v1974
        %v2189 = vsel %vm2183, %v2164, %v1976
        %v2191 = vsel %vm2183, %v2166, %v1978
        %v2193 = vsel %vm2183, %v2168, %v1980
        %v2195 = vsel %vm2183, %v2170, %v1982
        %v2197 = vsel %vm2183, %v2172, %v1984
        %v2199 = vsel %vm2183, %v2174, %v1986
        %v2201 = vsel %vm2183, %v2176, %v1988
        %v2203 = vsel %vm2183, %v2178, %v1990
        %v2205 = vsel %vm2183, %v2180, %v1992
        %v2207 = vsel %vm2183, %v2182, %v1994
        %vm2208 = vcmask 392192
        %v2210 = vsel %vm2208, %v2185, %v1997
        %v2212 = vsel %vm2208, %v2187, %v1999
        %v2214 = vsel %vm2208, %v2189, %v2001
        %v2216 = vsel %vm2208, %v2191, %v2003
        %v2218 = vsel %vm2208, %v2193, %v2005
        %v2220 = vsel %vm2208, %v2195, %v2007
        %v2222 = vsel %vm2208, %v2197, %v2009
        %v2224 = vsel %vm2208, %v2199, %v2011
        %v2226 = vsel %vm2208, %v2201, %v2013
        %v2228 = vsel %vm2208, %v2203, %v2015
        %v2230 = vsel %vm2208, %v2205, %v2017
        %v2232 = vsel %vm2208, %v2207, %v2019
        %vm2233 = vcmask 523264
        %v2235 = vsel %vm2233, %v2210, %v2034
        %v2237 = vsel %vm2233, %v2212, %v2036
        %v2239 = vsel %vm2233, %v2214, %v2038
        %v2241 = vsel %vm2233, %v2216, %v2040
        %v2243 = vsel %vm2233, %v2218, %v2042
        %v2245 = vsel %vm2233, %v2220, %v2044
        %v2247 = vsel %vm2233, %v2222, %v2046
        %v2249 = vsel %vm2233, %v2224, %v2048
        %v2251 = vsel %vm2233, %v2226, %v2050
        %v2253 = vsel %vm2233, %v2228, %v2052
        %v2255 = vsel %vm2233, %v2230, %v2054
        %v2257 = vsel %vm2233, %v2232, %v2056
        %vm2258 = vcmask 654336
        %v2260 = vsel %vm2258, %v2235, %v2066
        %v2262 = vsel %vm2258, %v2237, %v2068
        %v2264 = vsel %vm2258, %v2239, %v2070
        %v2266 = vsel %vm2258, %v2241, %v2072
        %v2268 = vsel %vm2258, %v2243, %v2074
        %v2270 = vsel %vm2258, %v2245, %v2076
        %v2272 = vsel %vm2258, %v2247, %v2078
        %v2274 = vsel %vm2258, %v2249, %v2080
        %v2276 = vsel %vm2258, %v2251, %v2082
        %v2278 = vsel %vm2258, %v2253, %v2084
        %v2280 = vsel %vm2258, %v2255, %v2086
        %v2282 = vsel %vm2258, %v2257, %v2088
        %vm2283 = vcmask 785408
        %v2285 = vsel %vm2283, %v2260, %v2091
        %v2287 = vsel %vm2283, %v2262, %v2093
        %v2289 = vsel %vm2283, %v2264, %v2095
        %v2291 = vsel %vm2283, %v2266, %v2097
        %v2293 = vsel %vm2283, %v2268, %v2099
        %v2295 = vsel %vm2283, %v2270, %v2101
        %v2297 = vsel %vm2283, %v2272, %v2103
        %v2299 = vsel %vm2283, %v2274, %v2105
        %v2301 = vsel %vm2283, %v2276, %v2107
        %v2303 = vsel %vm2283, %v2278, %v2109
        %v2305 = vsel %vm2283, %v2280, %v2111
        %v2307 = vsel %vm2283, %v2282, %v2113
        %vm2308 = vcmask 916480
        %v2310 = vsel %vm2308, %v2285, %v2128
        %v2313 = vsel %vm2308, %v2287, %v2130
        %v2316 = vsel %vm2308, %v2289, %v2132
        %v2319 = vsel %vm2308, %v2291, %v2134
        %v2322 = vsel %vm2308, %v2293, %v2136
        %v2325 = vsel %vm2308, %v2295, %v2138
        %v2328 = vsel %vm2308, %v2297, %v2140
        %v2331 = vsel %vm2308, %v2299, %v2142
        %v2334 = vsel %vm2308, %v2301, %v2144
        %v2337 = vsel %vm2308, %v2303, %v2146
        %v2340 = vsel %vm2308, %v2305, %v2148
        %v2343 = vsel %vm2308, %v2307, %v2150
        %v2345 = vld [vmem:[%s3] sm:$0xf]
        %v2346 = vld [vmem:[%s3 + $0x4] sm:$0xf]
        %v2347 = vld [vmem:[%s3 + $0x8] sm:$0xf]
        %v2348 = vld [vmem:[%s3 + $0xc] sm:$0xf]
        %v2349 = vld [vmem:[%s3 + $0x10] sm:$0xf]
        %v2350 = vld [vmem:[%s3 + $0x14] sm:$0xf]
        %v2351 = vld [vmem:[%s3 + $0x18] sm:$0xf]
        %v2352 = vld [vmem:[%s3 + $0x1c] sm:$0xf]
        %v2353 = vld [vmem:[%s3 + $0x20] sm:$0xf]
        %v2354 = vld [vmem:[%s3 + $0x24] sm:$0xf]
        %v2355 = vld [vmem:[%s3 + $0x28] sm:$0xf]
        %v2356 = vld [vmem:[%s3 + $0x2c] sm:$0xf]
        %v2357 = vld [vmem:[%s3 + $0x30] sm:$0xf]
        %v2358 = vld [vmem:[%s3 + $0x34] sm:$0xf]
        %v2359 = vld [vmem:[%s3 + $0x38] sm:$0xf]
        %v2360 = vld [vmem:[%s3 + $0x3c] sm:$0xf]
        %v2361 = vld [vmem:[%s3 + $0x40] sm:$0xf]
        %v2362 = vld [vmem:[%s3 + $0x44] sm:$0xf]
        %v2363 = vld [vmem:[%s4] sm:$0x1]
        %v2365 = vlaneseq
        %v2366 = vshrl.u32 %v2365, 7
        %v2367 = vsub.s32 0, %v2366
        %v2368 = vrot.slane %v2363, %v2367
        %v2388 = vunpack.c.l.b16 %v2345
        %v2389 = vunpack.c.l.b16 %v2346
        %v2390 = vunpack.c.l.b16 %v2347
        %v2391 = vunpack.c.l.b16 %v2348
        %v2392 = vunpack.c.l.b16 %v2349
        %v2393 = vunpack.c.l.b16 %v2350
        %v2394 = vunpack.c.l.b16 %v2351
        %v2395 = vunpack.c.l.b16 %v2352
        %v2396 = vunpack.c.l.b16 %v2353
        %v2397 = vunpack.c.l.b16 %v2354
        %v2398 = vunpack.c.l.b16 %v2355
        %v2399 = vunpack.c.l.b16 %v2356
        %v2400 = vunpack.c.l.b16 %v2357
        %v2401 = vunpack.c.l.b16 %v2358
        %v2402 = vunpack.c.l.b16 %v2359
        %v2403 = vunpack.c.l.b16 %v2360
        %v2404 = vunpack.c.l.b16 %v2361
        %v2405 = vunpack.c.l.b16 %v2362
        %v2406 = vpack.c.b16 %v2389, %v2388
        %v2407 = vpack.c.b16 %v2391, %v2390
        %v2408 = vpack.c.b16 %v2393, %v2392
        %v2409 = vpack.c.b16 %v2395, %v2394
        %v2410 = vpack.c.b16 %v2397, %v2396
        %v2411 = vpack.c.b16 %v2399, %v2398
        %v2412 = vpack.c.b16 %v2401, %v2400
        %v2413 = vpack.c.b16 %v2403, %v2402
        %v2414 = vpack.c.b16 %v2405, %v2404
        %v2425 = vsel %vm1646, %v2154, 0
        %v2428 = vsel %vm1646, %v1954, 0
        %v2431 = vsel %vm1646, %v1956, 0
        %v2434 = vsel %vm1646, %v1958, 0
        %v2437 = vsel %vm1646, %v1960, 0
        %v2440 = vsel %vm1646, %v1962, 0
        %v2443 = vsel %vm1646, %v1964, 0
        %v2446 = vsel %vm1646, %v1966, 0
        %v2449 = vsel %vm1646, %v1968, 0
        %v2452 = vsel %vm1646, %v2062, 0
        %v2455 = vsel %vm1646, %v2156, 0
        %v2458 = vsel %vm1646, %v2158, 0
        %2460 = vmatprep.subr.bf16.mxu0 0
        %2461 = vmatpush1.bf16.msra.mxu0 %v2406
        %2462 = vmatprep.subr.bf16.mxu0 0
        %2463 = vmatpush1.bf16.msra.mxu0 %v2407
        %2464 = vmatprep.subr.bf16.mxu0 0
        %2465 = vmatpush1.bf16.msra.mxu0 %v2408
        %2466 = vmatprep.subr.bf16.mxu0 0
        %2467 = vmatpush1.bf16.msra.mxu0 %v2409
        %2468 = vmatprep.subr.bf16.mxu0 0
        %2469 = vmatpush1.bf16.msra.mxu0 %v2410
        %2470 = vmatprep.subr.bf16.mxu0 0
        %2471 = vmatpush1.bf16.msra.mxu0 %v2411
        %2472 = vmatprep.subr.bf16.mxu0 0
        %2473 = vmatpush1.bf16.msra.mxu0 %v2412
        %2474 = vmatprep.subr.bf16.mxu0 0
        %2475 = vmatpush1.bf16.msra.mxu0 %v2413
        %2476 = vmatprep.subr.bf16.mxu0 0
        %2477 = vmatpush1.bf16.msra.mxu0 %v2414
        %2478 = vmatprep.subr.bf16.mxu0 0
        %2479 = vmatpush1.bf16.msra.mxu0 0
        %2480 = vmatprep.subr.bf16.mxu0 0
        %2481 = vmatpush1.bf16.msra.mxu0 0
        %2482 = vmatprep.subr.bf16.mxu0 0
        %2483 = vmatpush1.bf16.msra.mxu0 0
        %2484 = vmatprep.subr.bf16.mxu0 0
        %2485 = vmatpush1.bf16.msra.mxu0 0
        %2486 = vmatprep.subr.bf16.mxu0 0
        %2487 = vmatpush1.bf16.msra.mxu0 0
        %2488 = vmatprep.subr.bf16.mxu0 0
        %2489 = vmatpush1.bf16.msra.mxu0 0
        %2490 = vmatprep.subr.bf16.mxu0 0
        %2491 = vmatpush1.bf16.msra.mxu0 0
        %2492 = vmatprep.mubr.bf16.mxu0 %v2425
        %2493 = vmatmul.mubr.bf16.gmra.mrb[0].mxu0 %v2310
        %v2494 = vpop.f32.mrb[0].mxu0
        %v2495 = vadd.f32 %v2368, %v2494
        %v2496 = vpop.f32.mrb[0].mxu0
        %v2497 = vpop.f32.mrb[0].mxu0
        %v2498 = vadd.f32 %v2368, %v2497
        %v2499 = vpop.f32.mrb[0].mxu0
        %2500 = vmatprep.mubr.bf16.mxu0 %v2428
        %2501 = vmatmul.mubr.bf16.gmra.mrb[0].mxu0 %v2313
        %v2502 = vpop.f32.mrb[0].mxu0
        %v2503 = vadd.f32 %v2368, %v2502
        %v2504 = vpop.f32.mrb[0].mxu0
        %v2505 = vpop.f32.mrb[0].mxu0
        %v2506 = vadd.f32 %v2368, %v2505
        %v2507 = vpop.f32.mrb[0].mxu0
        %2508 = vmatprep.mubr.bf16.mxu0 %v2431
        %2509 = vmatmul.mubr.bf16.gmra.mrb[0].mxu0 %v2316
        %v2510 = vpop.f32.mrb[0].mxu0
        %v2511 = vadd.f32 %v2368, %v2510
        %v2512 = vpop.f32.mrb[0].mxu0
        %v2513 = vpop.f32.mrb[0].mxu0
        %v2514 = vadd.f32 %v2368, %v2513
        %v2515 = vpop.f32.mrb[0].mxu0
        %2516 = vmatprep.mubr.bf16.mxu0 %v2434
        %2517 = vmatmul.mubr.bf16.gmra.mrb[0].mxu0 %v2319
        %v2518 = vpop.f32.mrb[0].mxu0
        %v2519 = vadd.f32 %v2368, %v2518
        %v2520 = vpop.f32.mrb[0].mxu0
        %v2521 = vpop.f32.mrb[0].mxu0
        %v2522 = vadd.f32 %v2368, %v2521
        %v2523 = vpop.f32.mrb[0].mxu0
        %2524 = vmatprep.mubr.bf16.mxu0 %v2437
        %2525 = vmatmul.mubr.bf16.gmra.mrb[0].mxu0 %v2322
        %v2526 = vpop.f32.mrb[0].mxu0
        %v2527 = vadd.f32 %v2368, %v2526
        %v2528 = vpop.f32.mrb[0].mxu0
        %v2529 = vpop.f32.mrb[0].mxu0
        %v2530 = vadd.f32 %v2368, %v2529
        %v2531 = vpop.f32.mrb[0].mxu0
        %2532 = vmatprep.mubr.bf16.mxu0 %v2440
        %2533 = vmatmul.mubr.bf16.gmra.mrb[0].mxu0 %v2325
        %v2534 = vpop.f32.mrb[0].mxu0
        %v2535 = vadd.f32 %v2368, %v2534
        %v2536 = vpop.f32.mrb[0].mxu0
        %v2537 = vpop.f32.mrb[0].mxu0
        %v2538 = vadd.f32 %v2368, %v2537
        %v2539 = vpop.f32.mrb[0].mxu0
        %2540 = vmatprep.mubr.bf16.mxu0 %v2443
        %2541 = vmatmul.mubr.bf16.gmra.mrb[0].mxu0 %v2328
        %v2542 = vpop.f32.mrb[0].mxu0
        %v2543 = vadd.f32 %v2368, %v2542
        %v2544 = vpop.f32.mrb[0].mxu0
        %v2545 = vpop.f32.mrb[0].mxu0
        %v2546 = vadd.f32 %v2368, %v2545
        %v2547 = vpop.f32.mrb[0].mxu0
        %2548 = vmatprep.mubr.bf16.mxu0 %v2446
        %2549 = vmatmul.mubr.bf16.gmra.mrb[0].mxu0 %v2331
        %v2550 = vpop.f32.mrb[0].mxu0
        %v2551 = vadd.f32 %v2368, %v2550
        %v2552 = vpop.f32.mrb[0].mxu0
        %v2553 = vpop.f32.mrb[0].mxu0
        %v2554 = vadd.f32 %v2368, %v2553
        %v2555 = vpop.f32.mrb[0].mxu0
        %2556 = vmatprep.mubr.bf16.mxu0 %v2449
        %2557 = vmatmul.mubr.bf16.gmra.mrb[0].mxu0 %v2334
        %v2558 = vpop.f32.mrb[0].mxu0
        %v2559 = vadd.f32 %v2368, %v2558
        %v2560 = vpop.f32.mrb[0].mxu0
        %v2561 = vpop.f32.mrb[0].mxu0
        %v2562 = vadd.f32 %v2368, %v2561
        %v2563 = vpop.f32.mrb[0].mxu0
        %2564 = vmatprep.mubr.bf16.mxu0 %v2452
        %2565 = vmatmul.mubr.bf16.gmra.mrb[0].mxu0 %v2337
        %v2566 = vpop.f32.mrb[0].mxu0
        %v2567 = vadd.f32 %v2368, %v2566
        %v2568 = vpop.f32.mrb[0].mxu0
        %v2569 = vpop.f32.mrb[0].mxu0
        %v2570 = vadd.f32 %v2368, %v2569
        %v2571 = vpop.f32.mrb[0].mxu0
        %2572 = vmatprep.mubr.bf16.mxu0 %v2455
        %2573 = vmatmul.mubr.bf16.gmra.mrb[0].mxu0 %v2340
        %v2574 = vpop.f32.mrb[0].mxu0
        %v2575 = vadd.f32 %v2368, %v2574
        %v2576 = vpop.f32.mrb[0].mxu0
        %v2577 = vpop.f32.mrb[0].mxu0
        %v2578 = vadd.f32 %v2368, %v2577
        %v2579 = vpop.f32.mrb[0].mxu0
        %2580 = vmatprep.mubr.bf16.mxu0 %v2458
        %2581 = vmatmul.mubr.bf16.gmra.mrb[0].mxu0 %v2343
        %v2582 = vpop.f32.mrb[0].mxu0
        %v2583 = vadd.f32 %v2368, %v2582
        %v2584 = vpop.f32.mrb[0].mxu0
        %v2585 = vpop.f32.mrb[0].mxu0
        %v2586 = vadd.f32 %v2368, %v2585
        %v2587 = vpop.f32.mrb[0].mxu0
        %2588 = vdwg.mxu0
        %v2589 = vmax.f32 %v2495, 0.0
        %v2590 = vmax.f32 %v2498, 0.0
        %v2591 = vmax.f32 %v2503, 0.0
        %v2592 = vmax.f32 %v2506, 0.0
        %v2593 = vmax.f32 %v2511, 0.0
        %v2594 = vmax.f32 %v2514, 0.0
        %v2595 = vmax.f32 %v2519, 0.0
        %v2596 = vmax.f32 %v2522, 0.0
        %v2597 = vmax.f32 %v2527, 0.0
        %v2598 = vmax.f32 %v2530, 0.0
        %v2599 = vmax.f32 %v2535, 0.0
        %v2600 = vmax.f32 %v2538, 0.0
        %v2601 = vmax.f32 %v2543, 0.0
        %v2602 = vmax.f32 %v2546, 0.0
        %v2603 = vmax.f32 %v2551, 0.0
        %v2604 = vmax.f32 %v2554, 0.0
        %v2605 = vmax.f32 %v2559, 0.0
        %v2606 = vmax.f32 %v2562, 0.0
        %v2607 = vmax.f32 %v2567, 0.0
        %v2608 = vmax.f32 %v2570, 0.0
        %v2609 = vmax.f32 %v2575, 0.0
        %v2610 = vmax.f32 %v2578, 0.0
        %v2611 = vmax.f32 %v2583, 0.0
        %v2612 = vmax.f32 %v2586, 0.0
        %v2613 = vmax.f32 %v2589, %v2591
        %v2614 = vmax.f32 %v2590, %v2592
        %v2615 = vmax.f32 %v2613, %v2593
        %v2616 = vmax.f32 %v2614, %v2594
        %v2617 = vmax.f32 %v2615, %v2595
        %v2618 = vmax.f32 %v2616, %v2596
        %v2619 = vmax.f32 %v2617, %v2597
        %v2620 = vmax.f32 %v2618, %v2598
        %v2621 = vmax.f32 %v2619, %v2599
        %v2622 = vmax.f32 %v2620, %v2600
        %2623 = vst.msk [vmem:[#allocation3] sm:$0xff] %vm2183, %v2621
        %vm2624 = vcmask 257024
        %2625 = vst.msk [vmem:[#allocation3 + $0x8] sm:$0xf] %vm2624, %v2622
        %v2626 = vmax.f32 %v2601, %v2603
        %v2627 = vmax.f32 %v2602, %v2604
        %v2628 = vmax.f32 %v2626, %v2605
        %v2629 = vmax.f32 %v2627, %v2606
        %v2630 = vmax.f32 %v2628, %v2607
        %v2631 = vmax.f32 %v2629, %v2608
        %v2632 = vmax.f32 %v2630, %v2609
        %v2633 = vmax.f32 %v2631, %v2610
        %v2634 = vmax.f32 %v2632, %v2611
        %v2635 = vmax.f32 %v2633, %v2612
        %2636 = vst.msk [vmem:[#allocation3 + $0xc] sm:$0xff] %vm2183, %v2634
        %2637 = vst.msk [vmem:[#allocation3 + $0x14] sm:$0xf] %vm2624, %v2635
        %v2638 = vld [vmem:[#allocation3] ss:$6 sm:$0xf]
        %s2639 = scalar_lea.vmem [#allocation3], 1
        %v2640 = vld [vmem:[%s2639] ss:$6 sm:$0xf]
        %v2641 = vmax.f32 %v2638, %v2640
        %s2642 = scalar_lea.vmem [#allocation3], 2
        %v2643 = vld [vmem:[%s2642] ss:$6 sm:$0xf]
        %v2644 = vmax.f32 %v2641, %v2643
        %s2645 = scalar_lea.vmem [#allocation3], 3
        %v2646 = vld [vmem:[%s2645] ss:$6 sm:$0xf]
        %v2647 = vmax.f32 %v2644, %v2646
        %s2648 = scalar_lea.vmem [#allocation3], 4
        %v2649 = vld [vmem:[%s2648] ss:$6 sm:$0xf]
        %v2650 = vmax.f32 %v2647, %v2649
        %s2651 = scalar_lea.vmem [#allocation3], 5
        %v2652 = vld [vmem:[%s2651] ss:$6 sm:$0xf]
        %v2653 = vmax.f32 %v2650, %v2652
        %2654 = vst.msk [vmem:[%s218] sm:$0xf] %vm2624, %v2653
        %s2655 = sand.u32 %s137, 1
        %s2656 = scalar_lea.sflag [#allocation5], %s2655
        %s2657 = sand.u32 %s137, 1
        %s2658 = smul.addr %s2657, 4
        %s2659 = scalar_lea.vmem [#allocation4], %s2658
        // Predicated region
        $region41: #{tpu_custom_call.1} parent=39 // pred_check
          %p2660 = pneg %p147
        $region42: #{tpu_custom_call.1} parent=39 // pred_check_branch
          %2662 = sbr.rel (%p2660) target = $region44
        $region43: #{tpu_custom_call.1} parent=39 // pred_region
          %s2664 = ssub.s32 64, 64
          %2665 = vsyncadd %s2656, %s2664
          %s2666 = smul.addr %s19, 64
          %s2667 = scalar_lea.hbm %s5, %s2666
          %s2669 = sshll.u32 %s2659, 4
          %s2670 = int_to_ptr.vmem [resolvable:$true] %s2669
          %2672 = dma.vmem_to_hbm [thread:$0]  %s2670, 64, %s2667, %s2656
        $region44: #{tpu_custom_call.1} parent=39 // pred_fallthru
          _
      $region40: #{tpu_custom_call.1} parent=5 // pred_fallthru
        _
      %p2673 = scmp.le.s32.totalorder 2, %s14
      // Predicated region
      $region45: #{tpu_custom_call.1} parent=5 // pred_check
        %p2674 = pneg %p2673
      $region46: #{tpu_custom_call.1} parent=5 // pred_check_branch
        %2676 = sbr.rel (%p2674) target = $region48
      $region47: #{tpu_custom_call.1} parent=5 // pred_region
        %s2677 = ssub.s32 %s14, 2
        // Predicated region
        $region49: #{tpu_custom_call.1} parent=47 // pred_check
          %p2678 = pneg %p153
        $region50: #{tpu_custom_call.1} parent=47 // pred_check_branch
          %2680 = sbr.rel (%p2678) target = $region52
        $region51: #{tpu_custom_call.1} parent=47 // pred_region
          %s2681 = sand.u32 %s138, 1
          %s2682 = scalar_lea.sflag [#allocation5], %s2681
          %s2683 = sand.u32 %s138, 1
          %s2684 = smul.addr %s2683, 4
          %s2685 = scalar_lea.vmem [#allocation4], %s2684
          %2686 = dma.done %s2682, 64
        $region52: #{tpu_custom_call.1} parent=47 // pred_fallthru
          _
      $region48: #{tpu_custom_call.1} parent=5 // pred_fallthru
        _
    $region6: #{tpu_custom_call.1} parent=1 // loop_footer
      %s18 = sadd.s32 1, %s14
    $region7: #{tpu_custom_call.1} parent=1 // loop_footer_branch
      %13 = sbr.rel target = $region3
    $region8: #{tpu_custom_call.1} parent=1 // loop_exit
      _
    %2687 = vsyncpa [#allocation5], 1
    %s2688 = scalar_lea.sflag [#allocation5], 1
    %2689 = vsyncpa %s2688, 1

</llo_original>
